<compile_context>
chip_gen: v7x
topology: tpu7x:2x2x1
jax: 0.10.0
libtpu: 0.0.40
codegen_flags: <defaults>
</compile_context>

<pallas_src>
import functools

import jax
import jax.numpy as jnp
from jax.experimental import pallas as pl
from jax.experimental.pallas import tpu as pltpu


# ---------------------------------------------------------------------------
# Kernel
# ---------------------------------------------------------------------------
def _layernorm(x, gamma, beta, eps=1e-5):
    mu = jnp.mean(x, axis=-1, keepdims=True)
    var = jnp.mean((x - mu) ** 2, axis=-1, keepdims=True)
    return (x - mu) * jax.lax.rsqrt(var + eps) * gamma + beta


def _fused_forward_kernel(
    x_ref,                      # (tile_b, input_dim)   bf16
    emb_w_ref, emb_b_ref,       # (input_dim, D) bf16, (1, D) f32
    attn_w_ref,                 # (L, D, D)  bf16  = Wv @ Wo (pre-folded)
    ffn_w1_ref, ffn_w2_ref,     # (L, D, F) bf16, (L, F, D) bf16
    vecs_d_ref,                 # (L, 6, D) f32: attn_b, ln1_g, ln1_b, b2, ln2_g, ln2_b
    vecs_f_ref,                 # (L, 1, F) f32: b1
    fc_w_ref, fc_b_ref,         # (D, C_pad) bf16, (1, C_pad) f32   (C_pad = 128)
    o_ref,                      # (tile_b, C_pad) f32
    *, num_layers,
):
    f32 = jnp.float32
    bf16 = jnp.bfloat16

    # embedding Linear (bf16 operands, f32 accumulate)
    h = jnp.dot(x_ref[...], emb_w_ref[...], preferred_element_type=f32) + emb_b_ref[...]

    # unsqueeze(1): implicit length-1 sequence axis (kept implicit throughout)
    for l in range(num_layers):          # static unroll (L = 3)
        attn_w = attn_w_ref[l]           # (D, D)
        w1 = ffn_w1_ref[l]               # (D, F)
        w2 = ffn_w2_ref[l]               # (F, D)
        vd = vecs_d_ref[l]               # (6, D)  f32
        b1 = vecs_f_ref[l]               # (1, F)  f32
        attn_b = vd[0:1, :]
        ln1_g, ln1_b = vd[1:2, :], vd[2:3, :]
        b2 = vd[3:4, :]
        ln2_g, ln2_b = vd[4:5, :], vd[5:6, :]

        # self-attention (seq_len==1 => attn == out_proj(V), pre-folded matmul)
        attn = jnp.dot(h.astype(bf16), attn_w, preferred_element_type=f32) + attn_b
        # post-norm (PyTorch norm_first=False); dropout identity in eval
        h1 = _layernorm(h + attn, ln1_g, ln1_b)

        # feed-forward: Linear -> ReLU -> Linear   (elementwise math in f32)
        ff = jnp.dot(h1.astype(bf16), w1, preferred_element_type=f32) + b1
        ff = jnp.maximum(ff, 0.0)
        ff = jnp.dot(ff.astype(bf16), w2, preferred_element_type=f32) + b2
        h = _layernorm(h1 + ff, ln2_g, ln2_b)

    # mean over length-1 seq axis == identity; ReLU; Dropout == identity (eval)
    h = jnp.maximum(h, 0.0)
    # lane-dense (tile_b, 128) store; real logits live in columns [:num_classes]
    o_ref[...] = jnp.dot(h.astype(bf16), fc_w_ref[...],
                         preferred_element_type=f32) + fc_b_ref[...]


# ---------------------------------------------------------------------------
# Wrapper
# ---------------------------------------------------------------------------
def _round_up(x, m):
    return (x + m - 1) // m * m


def _select_tile_b(B, ffn_dim, max_tile_b):
    """Adaptive batch tile: amortize per-step overhead, respect VMEM, >=2 steps."""
    if B <= 8:
        return 8
    # VMEM-aware ceiling: keep the (tile_b, F) f32 FFN intermediate ~<= 8 MiB
    # per step (binding case: v7x's 64 MiB physical VMEM; v5e/v6e have 128 MiB).
    vmem_cap = max(128, (8 << 20) // (4 * max(ffn_dim, 1)))
    # Guarantee >= 2 grid steps for larger batches (v7x has 2 TensorCores).
    two_step = _round_up(pl.cdiv(B, 2), 8)
    return max(8, min(_round_up(max_tile_b, 8), vmem_cap, two_step))


def transformer_classifier(x, params, *, max_tile_b=4096):
    """Fused forward pass.  x: (B, input_dim) -> (B, num_classes) f32."""
    B, in_dim = x.shape
    L, D, _ = params["attn_w"].shape
    F = params["ffn_w1"].shape[2]
    C = int(params["num_classes"])
    C_pad = params["fc_w"].shape[1]

    tile_b = _select_tile_b(B, F, max_tile_b)
    B_pad = _round_up(B, tile_b)

    x_in = x.astype(jnp.bfloat16)
    if B_pad != B:
        x_in = jnp.pad(x_in, ((0, B_pad - B), (0, 0)))

    kernel = functools.partial(_fused_forward_kernel, num_layers=L)
    args = (
        x_in,
        params["emb_w"], params["emb_b"],
        params["attn_w"], params["ffn_w1"], params["ffn_w2"],
        params["vecs_d"], params["vecs_f"],
        params["fc_w"], params["fc_b"],
    )

    def resident(shape):
        nd = len(shape)
        return pl.BlockSpec(shape, lambda i, _nd=nd: (0,) * _nd)

    in_specs = [pl.BlockSpec((tile_b, in_dim), lambda i: (i, 0))]
    in_specs += [resident(a.shape) for a in args[1:]]
    out_specs = pl.BlockSpec((tile_b, C_pad), lambda i: (i, 0))

    # Explicit scoped-VMEM budget (defaults: 16 MiB v5e, 32 MiB v6e/v7x).
    weight_bytes = sum(int(a.size) * a.dtype.itemsize for a in args[1:])
    io_bytes = 2 * (tile_b * in_dim * 2 + tile_b * C_pad * 4)   # double-buffered tiles
    act_bytes = tile_b * (2 * D + F + C_pad) * 4                # live f32 intermediates
    vmem_limit = int(min(max(2 * (weight_bytes + io_bytes + act_bytes), 32 << 20),
                         56 << 20))                             # safe on v7x (64 MiB phys)

    out = pl.pallas_call(
        kernel,
        out_shape=jax.ShapeDtypeStruct((B_pad, C_pad), jnp.float32),
        grid=(B_pad // tile_b,),
        in_specs=in_specs,
        out_specs=out_specs,
        compiler_params=pltpu.CompilerParams(
            dimension_semantics=("parallel",),      # v7x: shard batch over 2 TCs
            vmem_limit_bytes=vmem_limit),
    )(*args)
    return out[:B, :C]


# ---------------------------------------------------------------------------
# Parameters: raw (PyTorch-like) + packed/folded form consumed by the kernel
# ---------------------------------------------------------------------------
def init_raw_params(key, input_dim, hidden_dim, num_layers, num_classes):
    ffn_dim = hidden_dim * 4

    def nrm(k, shape, scale=0.02):
        return scale * jax.random.normal(k, shape, jnp.float32)

    keys = jax.random.split(key, 2 + num_layers)
    raw = {
        "emb_w": nrm(keys[0], (input_dim, hidden_dim)),
        "emb_b": jnp.zeros((1, hidden_dim), jnp.float32),
        "fc_w": nrm(keys[1], (hidden_dim, num_classes)),
        "fc_b": jnp.zeros((1, num_classes), jnp.float32),
        "layers": [],
    }
    for l in range(num_layers):
        lk = jax.random.split(keys[2 + l], 8)
        raw["layers"].append({
            "wv": nrm(lk[0], (hidden_dim, hidden_dim)),   # value proj (in_proj slice)
            "bv": nrm(lk[1], (1, hidden_dim)),
            "wo": nrm(lk[2], (hidden_dim, hidden_dim)),   # out_proj
            "bo": nrm(lk[3], (1, hidden_dim)),
            "ln1_g": jnp.ones((1, hidden_dim), jnp.float32),
            "ln1_b": jnp.zeros((1, hidden_dim), jnp.float32),
            "w1": nrm(lk[4], (hidden_dim, ffn_dim)),
            "b1": nrm(lk[5], (1, ffn_dim)),
            "w2": nrm(lk[6], (ffn_dim, hidden_dim)),
            "b2": nrm(lk[7], (1, hidden_dim)),
            "ln2_g": jnp.ones((1, hidden_dim), jnp.float32),
            "ln2_b": jnp.zeros((1, hidden_dim), jnp.float32),
        })
    return raw


def pack_params(raw):
    """Fold Wv@Wo, pad fc to 128 lanes, stack slabs; weights bf16, vectors f32."""
    hp = jax.lax.Precision.HIGHEST
    bf16 = jnp.bfloat16
    layers = raw["layers"]
    num_classes = raw["fc_w"].shape[1]
    c_pad = max(128, _round_up(num_classes, 128))

    attn_w = jnp.stack([jnp.dot(l["wv"], l["wo"], precision=hp) for l in layers])
    vecs_d = jnp.stack([
        jnp.concatenate(
            [jnp.dot(l["bv"], l["wo"], precision=hp) + l["bo"],   # folded attn bias
             l["ln1_g"], l["ln1_b"], l["b2"], l["ln2_g"], l["ln2_b"]],
            axis=0)
        for l in layers])                                          # (L, 6, D) f32

    fc_w = jnp.pad(raw["fc_w"], ((0, 0), (0, c_pad - num_classes)))
    fc_b = jnp.pad(raw["fc_b"], ((0, 0), (0, c_pad - num_classes)))

    return {
        "emb_w": raw["emb_w"].astype(bf16),
        "emb_b": raw["emb_b"],                                      # f32
        "attn_w": attn_w.astype(bf16),
        "ffn_w1": jnp.stack([l["w1"] for l in layers]).astype(bf16),   # (L, D, F)
        "ffn_w2": jnp.stack([l["w2"] for l in layers]).astype(bf16),   # (L, F, D)
        "vecs_d": vecs_d,                                            # f32
        "vecs_f": jnp.stack([l["b1"] for l in layers]),              # (L, 1, F) f32
        "fc_w": fc_w.astype(bf16),                                   # (D, 128)
        "fc_b": fc_b,                                                # (1, 128) f32
        "num_classes": num_classes,
    }


# ---------------------------------------------------------------------------
# Pure-JAX reference (unfolded f32 math) for correctness checking
# ---------------------------------------------------------------------------
def reference_forward(x, raw):
    hp = jax.lax.Precision.HIGHEST
    h = jnp.dot(x, raw["emb_w"], precision=hp) + raw["emb_b"]
    for lp in raw["layers"]:
        v = jnp.dot(h, lp["wv"], precision=hp) + lp["bv"]
        attn = jnp.dot(v, lp["wo"], precision=hp) + lp["bo"]
        h1 = _layernorm(h + attn, lp["ln1_g"], lp["ln1_b"])
        ff = jnp.maximum(jnp.dot(h1, lp["w1"], precision=hp) + lp["b1"], 0.0)
        ff = jnp.dot(ff, lp["w2"], precision=hp) + lp["b2"]
        h = _layernorm(h1 + ff, lp["ln2_g"], lp["ln2_b"])
    h = jnp.maximum(h, 0.0)
    return jnp.dot(h, raw["fc_w"], precision=hp) + raw["fc_b"]


# ---------------------------------------------------------------------------
if __name__ == "__main__":
    # small shapes consistent with the module's forward
    B, input_dim, hidden_dim, num_heads, num_layers, num_classes = 8, 16, 32, 8, 3, 2

    key = jax.random.PRNGKey(0)
    kx, kp = jax.random.split(key)
    x = jax.random.normal(kx, (B, input_dim), jnp.float32)

    raw = init_raw_params(kp, input_dim, hidden_dim, num_layers, num_classes)
    params = pack_params(raw)

    # 1) small batch -> single-step grid, lane-dense padded output sliced back
    out = jax.block_until_ready(transformer_classifier(x, params))
    assert out.shape == (B, num_classes) and out.dtype == jnp.float32
    assert bool(jnp.all(jnp.isfinite(out)))
    ref = reference_forward(x, raw)
    assert bool(jnp.allclose(out, ref, atol=2e-2, rtol=2e-2))

    # 2) larger batch -> multi-step grid (>=2 steps), weights resident, "parallel"
    xb = jax.random.normal(jax.random.PRNGKey(1), (64, input_dim), jnp.float32)
    outb = jax.block_until_ready(transformer_classifier(xb, params))
    refb = reference_forward(xb, raw)
    assert outb.shape == (64, num_classes)
    assert bool(jnp.allclose(outb, refb, atol=2e-2, rtol=2e-2))

    # 3) non-divisible batch -> padded grid path (no whole-batch-in-VMEM fallback)
    xr = jax.random.normal(jax.random.PRNGKey(2), (37, input_dim), jnp.float32)
    outr = jax.block_until_ready(transformer_classifier(xr, params))
    refr = reference_forward(xr, raw)
    assert outr.shape == (37, num_classes)
    assert bool(jnp.allclose(outr, refr, atol=2e-2, rtol=2e-2))

    print("KERNEL_OK")
</pallas_src>

<mosaic_0001>
module attributes {stable_mosaic.version = 11 : i64} {
  func.func @_fused_forward_kernel(%arg0: i32, %arg1: memref<8x16xbf16, #tpu.memory_space<vmem>>, %arg2: memref<16x32xbf16, #tpu.memory_space<vmem>>, %arg3: memref<1x32xf32, #tpu.memory_space<vmem>>, %arg4: memref<3x32x32xbf16, #tpu.memory_space<vmem>>, %arg5: memref<3x32x128xbf16, #tpu.memory_space<vmem>>, %arg6: memref<3x128x32xbf16, #tpu.memory_space<vmem>>, %arg7: memref<3x6x32xf32, #tpu.memory_space<vmem>>, %arg8: memref<3x1x128xf32, #tpu.memory_space<vmem>>, %arg9: memref<32x128xbf16, #tpu.memory_space<vmem>>, %arg10: memref<1x128xf32, #tpu.memory_space<vmem>>, %arg11: memref<8x128xf32, #tpu.memory_space<vmem>>) attributes {dimension_semantics = [#tpu.dimension_semantics<parallel>], iteration_bounds = array<i64: 1>, scalar_prefetch = 0 : i64, scratch_operands = 0 : i64, tpu.core_type = #tpu.core_type<tc>, window_params = [{transform_indices = @transform_0, window_bounds = array<i64: 8, 16>}, {pipeline_mode = #tpu.pipeline_mode<synchronous>, transform_indices = @transform_1, window_bounds = array<i64: 16, 32>}, {pipeline_mode = #tpu.pipeline_mode<synchronous>, transform_indices = @transform_2, window_bounds = array<i64: 1, 32>}, {pipeline_mode = #tpu.pipeline_mode<synchronous>, transform_indices = @transform_3, window_bounds = array<i64: 3, 32, 32>}, {pipeline_mode = #tpu.pipeline_mode<synchronous>, transform_indices = @transform_4, window_bounds = array<i64: 3, 32, 128>}, {pipeline_mode = #tpu.pipeline_mode<synchronous>, transform_indices = @transform_5, window_bounds = array<i64: 3, 128, 32>}, {pipeline_mode = #tpu.pipeline_mode<synchronous>, transform_indices = @transform_6, window_bounds = array<i64: 3, 6, 32>}, {pipeline_mode = #tpu.pipeline_mode<synchronous>, transform_indices = @transform_7, window_bounds = array<i64: 3, 1, 128>}, {pipeline_mode = #tpu.pipeline_mode<synchronous>, transform_indices = @transform_8, window_bounds = array<i64: 32, 128>}, {pipeline_mode = #tpu.pipeline_mode<synchronous>, transform_indices = @transform_9, window_bounds = array<i64: 1, 128>}, {transform_indices = @transform_10, window_bounds = array<i64: 8, 128>}]} {
    %c0 = arith.constant 0 : index
    %c0_0 = arith.constant 0 : index
    %0 = vector.load %arg1[%c0, %c0_0] : memref<8x16xbf16, #tpu.memory_space<vmem>>, vector<8x16xbf16>
    %c0_1 = arith.constant 0 : index
    %c0_2 = arith.constant 0 : index
    %1 = vector.load %arg2[%c0_1, %c0_2] : memref<16x32xbf16, #tpu.memory_space<vmem>>, vector<16x32xbf16>
    %cst = arith.constant dense<0.000000e+00> : vector<8x32xf32>
    %2 = tpu.matmul %0, %1, %cst {dimension_numbers = #tpu.dot_dimension_numbers<[1], [0], [0], [1], [0, 0, 1, 1], [], []>} : vector<8x16xbf16>, vector<16x32xbf16>, vector<8x32xf32> -> vector<8x32xf32>
    %c0_3 = arith.constant 0 : index
    %c0_4 = arith.constant 0 : index
    %3 = vector.load %arg3[%c0_3, %c0_4] : memref<1x32xf32, #tpu.memory_space<vmem>>, vector<1x32xf32>
    %4 = vector.broadcast %3 : vector<1x32xf32> to vector<8x32xf32>
    %5 = arith.addf %2, %4 : vector<8x32xf32>
    %c0_5 = arith.constant 0 : index
    %c0_6 = arith.constant 0 : index
    %c0_7 = arith.constant 0 : index
    %6 = vector.load %arg4[%c0_5, %c0_6, %c0_7] : memref<3x32x32xbf16, #tpu.memory_space<vmem>>, vector<1x32x32xbf16>
    %7 = vector.shape_cast %6 : vector<1x32x32xbf16> to vector<32x32xbf16>
    %c0_8 = arith.constant 0 : index
    %c0_9 = arith.constant 0 : index
    %c0_10 = arith.constant 0 : index
    %8 = vector.load %arg5[%c0_8, %c0_9, %c0_10] : memref<3x32x128xbf16, #tpu.memory_space<vmem>>, vector<1x32x128xbf16>
    %9 = vector.shape_cast %8 : vector<1x32x128xbf16> to vector<32x128xbf16>
    %c0_11 = arith.constant 0 : index
    %c0_12 = arith.constant 0 : index
    %c0_13 = arith.constant 0 : index
    %10 = vector.load %arg6[%c0_11, %c0_12, %c0_13] : memref<3x128x32xbf16, #tpu.memory_space<vmem>>, vector<1x128x32xbf16>
    %11 = vector.shape_cast %10 : vector<1x128x32xbf16> to vector<128x32xbf16>
    %c0_14 = arith.constant 0 : index
    %c0_15 = arith.constant 0 : index
    %c0_16 = arith.constant 0 : index
    %12 = vector.load %arg7[%c0_14, %c0_15, %c0_16] : memref<3x6x32xf32, #tpu.memory_space<vmem>>, vector<1x6x32xf32>
    %13 = vector.shape_cast %12 : vector<1x6x32xf32> to vector<6x32xf32>
    %c0_17 = arith.constant 0 : index
    %c0_18 = arith.constant 0 : index
    %c0_19 = arith.constant 0 : index
    %14 = vector.load %arg8[%c0_17, %c0_18, %c0_19] : memref<3x1x128xf32, #tpu.memory_space<vmem>>, vector<1x1x128xf32>
    %15 = vector.shape_cast %14 : vector<1x1x128xf32> to vector<1x128xf32>
    %16 = vector.extract_strided_slice %13 {offsets = [0, 0], sizes = [1, 32], strides = [1, 1]} : vector<6x32xf32> to vector<1x32xf32>
    %17 = vector.extract_strided_slice %13 {offsets = [1, 0], sizes = [1, 32], strides = [1, 1]} : vector<6x32xf32> to vector<1x32xf32>
    %18 = vector.extract_strided_slice %13 {offsets = [2, 0], sizes = [1, 32], strides = [1, 1]} : vector<6x32xf32> to vector<1x32xf32>
    %19 = vector.extract_strided_slice %13 {offsets = [3, 0], sizes = [1, 32], strides = [1, 1]} : vector<6x32xf32> to vector<1x32xf32>
    %20 = vector.extract_strided_slice %13 {offsets = [4, 0], sizes = [1, 32], strides = [1, 1]} : vector<6x32xf32> to vector<1x32xf32>
    %21 = vector.extract_strided_slice %13 {offsets = [5, 0], sizes = [1, 32], strides = [1, 1]} : vector<6x32xf32> to vector<1x32xf32>
    %22 = arith.truncf %5 : vector<8x32xf32> to vector<8x32xbf16>
    %cst_20 = arith.constant dense<0.000000e+00> : vector<8x32xf32>
    %23 = tpu.matmul %22, %7, %cst_20 {dimension_numbers = #tpu.dot_dimension_numbers<[1], [0], [0], [1], [0, 0, 1, 1], [], []>} : vector<8x32xbf16>, vector<32x32xbf16>, vector<8x32xf32> -> vector<8x32xf32>
    %24 = vector.broadcast %16 : vector<1x32xf32> to vector<8x32xf32>
    %25 = arith.addf %23, %24 : vector<8x32xf32>
    %26 = arith.addf %5, %25 : vector<8x32xf32>
    %cst_21 = arith.constant dense<0.000000e+00> : vector<8xf32>
    %27 = vector.multi_reduction <add>, %26, %cst_21 [1] : vector<8x32xf32> to vector<8xf32>
    %28 = vector.shape_cast %27 : vector<8xf32> to vector<8x1xf32>
    %cst_22 = arith.constant 3.200000e+01 : f32
    %29 = vector.broadcast %cst_22 : f32 to vector<8x1xf32>
    %30 = arith.divf %28, %29 : vector<8x1xf32>
    %31 = vector.broadcast %30 : vector<8x1xf32> to vector<8x32xf32>
    %32 = arith.subf %26, %31 : vector<8x32xf32>
    %33 = arith.mulf %32, %32 : vector<8x32xf32>
    %cst_23 = arith.constant dense<0.000000e+00> : vector<8xf32>
    %34 = vector.multi_reduction <add>, %33, %cst_23 [1] : vector<8x32xf32> to vector<8xf32>
    %35 = vector.shape_cast %34 : vector<8xf32> to vector<8x1xf32>
    %cst_24 = arith.constant 3.200000e+01 : f32
    %36 = vector.broadcast %cst_24 : f32 to vector<8x1xf32>
    %37 = arith.divf %35, %36 : vector<8x1xf32>
    %38 = vector.broadcast %30 : vector<8x1xf32> to vector<8x32xf32>
    %39 = arith.subf %26, %38 : vector<8x32xf32>
    %cst_25 = arith.constant 9.99999974E-6 : f32
    %40 = vector.broadcast %cst_25 : f32 to vector<8x1xf32>
    %41 = arith.addf %37, %40 : vector<8x1xf32>
    %42 = math.rsqrt %41 : vector<8x1xf32>
    %43 = vector.broadcast %42 : vector<8x1xf32> to vector<8x32xf32>
    %44 = arith.mulf %39, %43 : vector<8x32xf32>
    %45 = vector.broadcast %17 : vector<1x32xf32> to vector<8x32xf32>
    %46 = arith.mulf %44, %45 : vector<8x32xf32>
    %47 = vector.broadcast %18 : vector<1x32xf32> to vector<8x32xf32>
    %48 = arith.addf %46, %47 : vector<8x32xf32>
    %49 = arith.truncf %48 : vector<8x32xf32> to vector<8x32xbf16>
    %cst_26 = arith.constant dense<0.000000e+00> : vector<8x128xf32>
    %50 = tpu.matmul %49, %9, %cst_26 {dimension_numbers = #tpu.dot_dimension_numbers<[1], [0], [0], [1], [0, 0, 1, 1], [], []>} : vector<8x32xbf16>, vector<32x128xbf16>, vector<8x128xf32> -> vector<8x128xf32>
    %51 = vector.broadcast %15 : vector<1x128xf32> to vector<8x128xf32>
    %52 = arith.addf %50, %51 : vector<8x128xf32>
    %cst_27 = arith.constant 0.000000e+00 : f32
    %53 = vector.broadcast %cst_27 : f32 to vector<8x128xf32>
    %54 = arith.maximumf %52, %53 : vector<8x128xf32>
    %55 = arith.truncf %54 : vector<8x128xf32> to vector<8x128xbf16>
    %cst_28 = arith.constant dense<0.000000e+00> : vector<8x32xf32>
    %56 = tpu.matmul %55, %11, %cst_28 {dimension_numbers = #tpu.dot_dimension_numbers<[1], [0], [0], [1], [0, 0, 1, 1], [], []>} : vector<8x128xbf16>, vector<128x32xbf16>, vector<8x32xf32> -> vector<8x32xf32>
    %57 = vector.broadcast %19 : vector<1x32xf32> to vector<8x32xf32>
    %58 = arith.addf %56, %57 : vector<8x32xf32>
    %59 = arith.addf %48, %58 : vector<8x32xf32>
    %cst_29 = arith.constant dense<0.000000e+00> : vector<8xf32>
    %60 = vector.multi_reduction <add>, %59, %cst_29 [1] : vector<8x32xf32> to vector<8xf32>
    %61 = vector.shape_cast %60 : vector<8xf32> to vector<8x1xf32>
    %cst_30 = arith.constant 3.200000e+01 : f32
    %62 = vector.broadcast %cst_30 : f32 to vector<8x1xf32>
    %63 = arith.divf %61, %62 : vector<8x1xf32>
    %64 = vector.broadcast %63 : vector<8x1xf32> to vector<8x32xf32>
    %65 = arith.subf %59, %64 : vector<8x32xf32>
    %66 = arith.mulf %65, %65 : vector<8x32xf32>
    %cst_31 = arith.constant dense<0.000000e+00> : vector<8xf32>
    %67 = vector.multi_reduction <add>, %66, %cst_31 [1] : vector<8x32xf32> to vector<8xf32>
    %68 = vector.shape_cast %67 : vector<8xf32> to vector<8x1xf32>
    %cst_32 = arith.constant 3.200000e+01 : f32
    %69 = vector.broadcast %cst_32 : f32 to vector<8x1xf32>
    %70 = arith.divf %68, %69 : vector<8x1xf32>
    %71 = vector.broadcast %63 : vector<8x1xf32> to vector<8x32xf32>
    %72 = arith.subf %59, %71 : vector<8x32xf32>
    %cst_33 = arith.constant 9.99999974E-6 : f32
    %73 = vector.broadcast %cst_33 : f32 to vector<8x1xf32>
    %74 = arith.addf %70, %73 : vector<8x1xf32>
    %75 = math.rsqrt %74 : vector<8x1xf32>
    %76 = vector.broadcast %75 : vector<8x1xf32> to vector<8x32xf32>
    %77 = arith.mulf %72, %76 : vector<8x32xf32>
    %78 = vector.broadcast %20 : vector<1x32xf32> to vector<8x32xf32>
    %79 = arith.mulf %77, %78 : vector<8x32xf32>
    %80 = vector.broadcast %21 : vector<1x32xf32> to vector<8x32xf32>
    %81 = arith.addf %79, %80 : vector<8x32xf32>
    %c1 = arith.constant 1 : index
    %c0_34 = arith.constant 0 : index
    %c0_35 = arith.constant 0 : index
    %82 = vector.load %arg4[%c1, %c0_34, %c0_35] : memref<3x32x32xbf16, #tpu.memory_space<vmem>>, vector<1x32x32xbf16>
    %83 = vector.shape_cast %82 : vector<1x32x32xbf16> to vector<32x32xbf16>
    %c1_36 = arith.constant 1 : index
    %c0_37 = arith.constant 0 : index
    %c0_38 = arith.constant 0 : index
    %84 = vector.load %arg5[%c1_36, %c0_37, %c0_38] : memref<3x32x128xbf16, #tpu.memory_space<vmem>>, vector<1x32x128xbf16>
    %85 = vector.shape_cast %84 : vector<1x32x128xbf16> to vector<32x128xbf16>
    %c1_39 = arith.constant 1 : index
    %c0_40 = arith.constant 0 : index
    %c0_41 = arith.constant 0 : index
    %86 = vector.load %arg6[%c1_39, %c0_40, %c0_41] : memref<3x128x32xbf16, #tpu.memory_space<vmem>>, vector<1x128x32xbf16>
    %87 = vector.shape_cast %86 : vector<1x128x32xbf16> to vector<128x32xbf16>
    %c1_42 = arith.constant 1 : index
    %c0_43 = arith.constant 0 : index
    %c0_44 = arith.constant 0 : index
    %88 = vector.load %arg7[%c1_42, %c0_43, %c0_44] : memref<3x6x32xf32, #tpu.memory_space<vmem>>, vector<1x6x32xf32>
    %89 = vector.shape_cast %88 : vector<1x6x32xf32> to vector<6x32xf32>
    %c1_45 = arith.constant 1 : index
    %c0_46 = arith.constant 0 : index
    %c0_47 = arith.constant 0 : index
    %90 = vector.load %arg8[%c1_45, %c0_46, %c0_47] : memref<3x1x128xf32, #tpu.memory_space<vmem>>, vector<1x1x128xf32>
    %91 = vector.shape_cast %90 : vector<1x1x128xf32> to vector<1x128xf32>
    %92 = vector.extract_strided_slice %89 {offsets = [0, 0], sizes = [1, 32], strides = [1, 1]} : vector<6x32xf32> to vector<1x32xf32>
    %93 = vector.extract_strided_slice %89 {offsets = [1, 0], sizes = [1, 32], strides = [1, 1]} : vector<6x32xf32> to vector<1x32xf32>
    %94 = vector.extract_strided_slice %89 {offsets = [2, 0], sizes = [1, 32], strides = [1, 1]} : vector<6x32xf32> to vector<1x32xf32>
    %95 = vector.extract_strided_slice %89 {offsets = [3, 0], sizes = [1, 32], strides = [1, 1]} : vector<6x32xf32> to vector<1x32xf32>
    %96 = vector.extract_strided_slice %89 {offsets = [4, 0], sizes = [1, 32], strides = [1, 1]} : vector<6x32xf32> to vector<1x32xf32>
    %97 = vector.extract_strided_slice %89 {offsets = [5, 0], sizes = [1, 32], strides = [1, 1]} : vector<6x32xf32> to vector<1x32xf32>
    %98 = arith.truncf %81 : vector<8x32xf32> to vector<8x32xbf16>
    %cst_48 = arith.constant dense<0.000000e+00> : vector<8x32xf32>
    %99 = tpu.matmul %98, %83, %cst_48 {dimension_numbers = #tpu.dot_dimension_numbers<[1], [0], [0], [1], [0, 0, 1, 1], [], []>} : vector<8x32xbf16>, vector<32x32xbf16>, vector<8x32xf32> -> vector<8x32xf32>
    %100 = vector.broadcast %92 : vector<1x32xf32> to vector<8x32xf32>
    %101 = arith.addf %99, %100 : vector<8x32xf32>
    %102 = arith.addf %81, %101 : vector<8x32xf32>
    %cst_49 = arith.constant dense<0.000000e+00> : vector<8xf32>
    %103 = vector.multi_reduction <add>, %102, %cst_49 [1] : vector<8x32xf32> to vector<8xf32>
    %104 = vector.shape_cast %103 : vector<8xf32> to vector<8x1xf32>
    %cst_50 = arith.constant 3.200000e+01 : f32
    %105 = vector.broadcast %cst_50 : f32 to vector<8x1xf32>
    %106 = arith.divf %104, %105 : vector<8x1xf32>
    %107 = vector.broadcast %106 : vector<8x1xf32> to vector<8x32xf32>
    %108 = arith.subf %102, %107 : vector<8x32xf32>
    %109 = arith.mulf %108, %108 : vector<8x32xf32>
    %cst_51 = arith.constant dense<0.000000e+00> : vector<8xf32>
    %110 = vector.multi_reduction <add>, %109, %cst_51 [1] : vector<8x32xf32> to vector<8xf32>
    %111 = vector.shape_cast %110 : vector<8xf32> to vector<8x1xf32>
    %cst_52 = arith.constant 3.200000e+01 : f32
    %112 = vector.broadcast %cst_52 : f32 to vector<8x1xf32>
    %113 = arith.divf %111, %112 : vector<8x1xf32>
    %114 = vector.broadcast %106 : vector<8x1xf32> to vector<8x32xf32>
    %115 = arith.subf %102, %114 : vector<8x32xf32>
    %cst_53 = arith.constant 9.99999974E-6 : f32
    %116 = vector.broadcast %cst_53 : f32 to vector<8x1xf32>
    %117 = arith.addf %113, %116 : vector<8x1xf32>
    %118 = math.rsqrt %117 : vector<8x1xf32>
    %119 = vector.broadcast %118 : vector<8x1xf32> to vector<8x32xf32>
    %120 = arith.mulf %115, %119 : vector<8x32xf32>
    %121 = vector.broadcast %93 : vector<1x32xf32> to vector<8x32xf32>
    %122 = arith.mulf %120, %121 : vector<8x32xf32>
    %123 = vector.broadcast %94 : vector<1x32xf32> to vector<8x32xf32>
    %124 = arith.addf %122, %123 : vector<8x32xf32>
    %125 = arith.truncf %124 : vector<8x32xf32> to vector<8x32xbf16>
    %cst_54 = arith.constant dense<0.000000e+00> : vector<8x128xf32>
    %126 = tpu.matmul %125, %85, %cst_54 {dimension_numbers = #tpu.dot_dimension_numbers<[1], [0], [0], [1], [0, 0, 1, 1], [], []>} : vector<8x32xbf16>, vector<32x128xbf16>, vector<8x128xf32> -> vector<8x128xf32>
    %127 = vector.broadcast %91 : vector<1x128xf32> to vector<8x128xf32>
    %128 = arith.addf %126, %127 : vector<8x128xf32>
    %cst_55 = arith.constant 0.000000e+00 : f32
    %129 = vector.broadcast %cst_55 : f32 to vector<8x128xf32>
    %130 = arith.maximumf %128, %129 : vector<8x128xf32>
    %131 = arith.truncf %130 : vector<8x128xf32> to vector<8x128xbf16>
    %cst_56 = arith.constant dense<0.000000e+00> : vector<8x32xf32>
    %132 = tpu.matmul %131, %87, %cst_56 {dimension_numbers = #tpu.dot_dimension_numbers<[1], [0], [0], [1], [0, 0, 1, 1], [], []>} : vector<8x128xbf16>, vector<128x32xbf16>, vector<8x32xf32> -> vector<8x32xf32>
    %133 = vector.broadcast %95 : vector<1x32xf32> to vector<8x32xf32>
    %134 = arith.addf %132, %133 : vector<8x32xf32>
    %135 = arith.addf %124, %134 : vector<8x32xf32>
    %cst_57 = arith.constant dense<0.000000e+00> : vector<8xf32>
    %136 = vector.multi_reduction <add>, %135, %cst_57 [1] : vector<8x32xf32> to vector<8xf32>
    %137 = vector.shape_cast %136 : vector<8xf32> to vector<8x1xf32>
    %cst_58 = arith.constant 3.200000e+01 : f32
    %138 = vector.broadcast %cst_58 : f32 to vector<8x1xf32>
    %139 = arith.divf %137, %138 : vector<8x1xf32>
    %140 = vector.broadcast %139 : vector<8x1xf32> to vector<8x32xf32>
    %141 = arith.subf %135, %140 : vector<8x32xf32>
    %142 = arith.mulf %141, %141 : vector<8x32xf32>
    %cst_59 = arith.constant dense<0.000000e+00> : vector<8xf32>
    %143 = vector.multi_reduction <add>, %142, %cst_59 [1] : vector<8x32xf32> to vector<8xf32>
    %144 = vector.shape_cast %143 : vector<8xf32> to vector<8x1xf32>
    %cst_60 = arith.constant 3.200000e+01 : f32
    %145 = vector.broadcast %cst_60 : f32 to vector<8x1xf32>
    %146 = arith.divf %144, %145 : vector<8x1xf32>
    %147 = vector.broadcast %139 : vector<8x1xf32> to vector<8x32xf32>
    %148 = arith.subf %135, %147 : vector<8x32xf32>
    %cst_61 = arith.constant 9.99999974E-6 : f32
    %149 = vector.broadcast %cst_61 : f32 to vector<8x1xf32>
    %150 = arith.addf %146, %149 : vector<8x1xf32>
    %151 = math.rsqrt %150 : vector<8x1xf32>
    %152 = vector.broadcast %151 : vector<8x1xf32> to vector<8x32xf32>
    %153 = arith.mulf %148, %152 : vector<8x32xf32>
    %154 = vector.broadcast %96 : vector<1x32xf32> to vector<8x32xf32>
    %155 = arith.mulf %153, %154 : vector<8x32xf32>
    %156 = vector.broadcast %97 : vector<1x32xf32> to vector<8x32xf32>
    %157 = arith.addf %155, %156 : vector<8x32xf32>
    %c2 = arith.constant 2 : index
    %c0_62 = arith.constant 0 : index
    %c0_63 = arith.constant 0 : index
    %158 = vector.load %arg4[%c2, %c0_62, %c0_63] : memref<3x32x32xbf16, #tpu.memory_space<vmem>>, vector<1x32x32xbf16>
    %159 = vector.shape_cast %158 : vector<1x32x32xbf16> to vector<32x32xbf16>
    %c2_64 = arith.constant 2 : index
    %c0_65 = arith.constant 0 : index
    %c0_66 = arith.constant 0 : index
    %160 = vector.load %arg5[%c2_64, %c0_65, %c0_66] : memref<3x32x128xbf16, #tpu.memory_space<vmem>>, vector<1x32x128xbf16>
    %161 = vector.shape_cast %160 : vector<1x32x128xbf16> to vector<32x128xbf16>
    %c2_67 = arith.constant 2 : index
    %c0_68 = arith.constant 0 : index
    %c0_69 = arith.constant 0 : index
    %162 = vector.load %arg6[%c2_67, %c0_68, %c0_69] : memref<3x128x32xbf16, #tpu.memory_space<vmem>>, vector<1x128x32xbf16>
    %163 = vector.shape_cast %162 : vector<1x128x32xbf16> to vector<128x32xbf16>
    %c2_70 = arith.constant 2 : index
    %c0_71 = arith.constant 0 : index
    %c0_72 = arith.constant 0 : index
    %164 = vector.load %arg7[%c2_70, %c0_71, %c0_72] : memref<3x6x32xf32, #tpu.memory_space<vmem>>, vector<1x6x32xf32>
    %165 = vector.shape_cast %164 : vector<1x6x32xf32> to vector<6x32xf32>
    %c2_73 = arith.constant 2 : index
    %c0_74 = arith.constant 0 : index
    %c0_75 = arith.constant 0 : index
    %166 = vector.load %arg8[%c2_73, %c0_74, %c0_75] : memref<3x1x128xf32, #tpu.memory_space<vmem>>, vector<1x1x128xf32>
    %167 = vector.shape_cast %166 : vector<1x1x128xf32> to vector<1x128xf32>
    %168 = vector.extract_strided_slice %165 {offsets = [0, 0], sizes = [1, 32], strides = [1, 1]} : vector<6x32xf32> to vector<1x32xf32>
    %169 = vector.extract_strided_slice %165 {offsets = [1, 0], sizes = [1, 32], strides = [1, 1]} : vector<6x32xf32> to vector<1x32xf32>
    %170 = vector.extract_strided_slice %165 {offsets = [2, 0], sizes = [1, 32], strides = [1, 1]} : vector<6x32xf32> to vector<1x32xf32>
    %171 = vector.extract_strided_slice %165 {offsets = [3, 0], sizes = [1, 32], strides = [1, 1]} : vector<6x32xf32> to vector<1x32xf32>
    %172 = vector.extract_strided_slice %165 {offsets = [4, 0], sizes = [1, 32], strides = [1, 1]} : vector<6x32xf32> to vector<1x32xf32>
    %173 = vector.extract_strided_slice %165 {offsets = [5, 0], sizes = [1, 32], strides = [1, 1]} : vector<6x32xf32> to vector<1x32xf32>
    %174 = arith.truncf %157 : vector<8x32xf32> to vector<8x32xbf16>
    %cst_76 = arith.constant dense<0.000000e+00> : vector<8x32xf32>
    %175 = tpu.matmul %174, %159, %cst_76 {dimension_numbers = #tpu.dot_dimension_numbers<[1], [0], [0], [1], [0, 0, 1, 1], [], []>} : vector<8x32xbf16>, vector<32x32xbf16>, vector<8x32xf32> -> vector<8x32xf32>
    %176 = vector.broadcast %168 : vector<1x32xf32> to vector<8x32xf32>
    %177 = arith.addf %175, %176 : vector<8x32xf32>
    %178 = arith.addf %157, %177 : vector<8x32xf32>
    %cst_77 = arith.constant dense<0.000000e+00> : vector<8xf32>
    %179 = vector.multi_reduction <add>, %178, %cst_77 [1] : vector<8x32xf32> to vector<8xf32>
    %180 = vector.shape_cast %179 : vector<8xf32> to vector<8x1xf32>
    %cst_78 = arith.constant 3.200000e+01 : f32
    %181 = vector.broadcast %cst_78 : f32 to vector<8x1xf32>
    %182 = arith.divf %180, %181 : vector<8x1xf32>
    %183 = vector.broadcast %182 : vector<8x1xf32> to vector<8x32xf32>
    %184 = arith.subf %178, %183 : vector<8x32xf32>
    %185 = arith.mulf %184, %184 : vector<8x32xf32>
    %cst_79 = arith.constant dense<0.000000e+00> : vector<8xf32>
    %186 = vector.multi_reduction <add>, %185, %cst_79 [1] : vector<8x32xf32> to vector<8xf32>
    %187 = vector.shape_cast %186 : vector<8xf32> to vector<8x1xf32>
    %cst_80 = arith.constant 3.200000e+01 : f32
    %188 = vector.broadcast %cst_80 : f32 to vector<8x1xf32>
    %189 = arith.divf %187, %188 : vector<8x1xf32>
    %190 = vector.broadcast %182 : vector<8x1xf32> to vector<8x32xf32>
    %191 = arith.subf %178, %190 : vector<8x32xf32>
    %cst_81 = arith.constant 9.99999974E-6 : f32
    %192 = vector.broadcast %cst_81 : f32 to vector<8x1xf32>
    %193 = arith.addf %189, %192 : vector<8x1xf32>
    %194 = math.rsqrt %193 : vector<8x1xf32>
    %195 = vector.broadcast %194 : vector<8x1xf32> to vector<8x32xf32>
    %196 = arith.mulf %191, %195 : vector<8x32xf32>
    %197 = vector.broadcast %169 : vector<1x32xf32> to vector<8x32xf32>
    %198 = arith.mulf %196, %197 : vector<8x32xf32>
    %199 = vector.broadcast %170 : vector<1x32xf32> to vector<8x32xf32>
    %200 = arith.addf %198, %199 : vector<8x32xf32>
    %201 = arith.truncf %200 : vector<8x32xf32> to vector<8x32xbf16>
    %cst_82 = arith.constant dense<0.000000e+00> : vector<8x128xf32>
    %202 = tpu.matmul %201, %161, %cst_82 {dimension_numbers = #tpu.dot_dimension_numbers<[1], [0], [0], [1], [0, 0, 1, 1], [], []>} : vector<8x32xbf16>, vector<32x128xbf16>, vector<8x128xf32> -> vector<8x128xf32>
    %203 = vector.broadcast %167 : vector<1x128xf32> to vector<8x128xf32>
    %204 = arith.addf %202, %203 : vector<8x128xf32>
    %cst_83 = arith.constant 0.000000e+00 : f32
    %205 = vector.broadcast %cst_83 : f32 to vector<8x128xf32>
    %206 = arith.maximumf %204, %205 : vector<8x128xf32>
    %207 = arith.truncf %206 : vector<8x128xf32> to vector<8x128xbf16>
    %cst_84 = arith.constant dense<0.000000e+00> : vector<8x32xf32>
    %208 = tpu.matmul %207, %163, %cst_84 {dimension_numbers = #tpu.dot_dimension_numbers<[1], [0], [0], [1], [0, 0, 1, 1], [], []>} : vector<8x128xbf16>, vector<128x32xbf16>, vector<8x32xf32> -> vector<8x32xf32>
    %209 = vector.broadcast %171 : vector<1x32xf32> to vector<8x32xf32>
    %210 = arith.addf %208, %209 : vector<8x32xf32>
    %211 = arith.addf %200, %210 : vector<8x32xf32>
    %cst_85 = arith.constant dense<0.000000e+00> : vector<8xf32>
    %212 = vector.multi_reduction <add>, %211, %cst_85 [1] : vector<8x32xf32> to vector<8xf32>
    %213 = vector.shape_cast %212 : vector<8xf32> to vector<8x1xf32>
    %cst_86 = arith.constant 3.200000e+01 : f32
    %214 = vector.broadcast %cst_86 : f32 to vector<8x1xf32>
    %215 = arith.divf %213, %214 : vector<8x1xf32>
    %216 = vector.broadcast %215 : vector<8x1xf32> to vector<8x32xf32>
    %217 = arith.subf %211, %216 : vector<8x32xf32>
    %218 = arith.mulf %217, %217 : vector<8x32xf32>
    %cst_87 = arith.constant dense<0.000000e+00> : vector<8xf32>
    %219 = vector.multi_reduction <add>, %218, %cst_87 [1] : vector<8x32xf32> to vector<8xf32>
    %220 = vector.shape_cast %219 : vector<8xf32> to vector<8x1xf32>
    %cst_88 = arith.constant 3.200000e+01 : f32
    %221 = vector.broadcast %cst_88 : f32 to vector<8x1xf32>
    %222 = arith.divf %220, %221 : vector<8x1xf32>
    %223 = vector.broadcast %215 : vector<8x1xf32> to vector<8x32xf32>
    %224 = arith.subf %211, %223 : vector<8x32xf32>
    %cst_89 = arith.constant 9.99999974E-6 : f32
    %225 = vector.broadcast %cst_89 : f32 to vector<8x1xf32>
    %226 = arith.addf %222, %225 : vector<8x1xf32>
    %227 = math.rsqrt %226 : vector<8x1xf32>
    %228 = vector.broadcast %227 : vector<8x1xf32> to vector<8x32xf32>
    %229 = arith.mulf %224, %228 : vector<8x32xf32>
    %230 = vector.broadcast %172 : vector<1x32xf32> to vector<8x32xf32>
    %231 = arith.mulf %229, %230 : vector<8x32xf32>
    %232 = vector.broadcast %173 : vector<1x32xf32> to vector<8x32xf32>
    %233 = arith.addf %231, %232 : vector<8x32xf32>
    %cst_90 = arith.constant 0.000000e+00 : f32
    %234 = vector.broadcast %cst_90 : f32 to vector<8x32xf32>
    %235 = arith.maximumf %233, %234 : vector<8x32xf32>
    %236 = arith.truncf %235 : vector<8x32xf32> to vector<8x32xbf16>
    %c0_91 = arith.constant 0 : index
    %c0_92 = arith.constant 0 : index
    %237 = vector.load %arg9[%c0_91, %c0_92] : memref<32x128xbf16, #tpu.memory_space<vmem>>, vector<32x128xbf16>
    %cst_93 = arith.constant dense<0.000000e+00> : vector<8x128xf32>
    %238 = tpu.matmul %236, %237, %cst_93 {dimension_numbers = #tpu.dot_dimension_numbers<[1], [0], [0], [1], [0, 0, 1, 1], [], []>} : vector<8x32xbf16>, vector<32x128xbf16>, vector<8x128xf32> -> vector<8x128xf32>
    %c0_94 = arith.constant 0 : index
    %c0_95 = arith.constant 0 : index
    %239 = vector.load %arg10[%c0_94, %c0_95] : memref<1x128xf32, #tpu.memory_space<vmem>>, vector<1x128xf32>
    %240 = vector.broadcast %239 : vector<1x128xf32> to vector<8x128xf32>
    %241 = arith.addf %238, %240 : vector<8x128xf32>
    %c0_96 = arith.constant 0 : index
    %c0_97 = arith.constant 0 : index
    %242 = vector.load %arg11[%c0_96, %c0_97] : memref<8x128xf32, #tpu.memory_space<vmem>>, vector<8x128xf32>
    tpu.vector_store %arg11[%c0_96, %c0_97], %241 {strides = array<i32>} : memref<8x128xf32, #tpu.memory_space<vmem>>, vector<8x128xf32>,
    return
  }
  func.func @transform_0(%arg0: i32) -> (i32, i32) {
    %c0_i32 = arith.constant 0 : i32
    %c0_i32_0 = arith.constant 0 : i32
    return %arg0, %c0_i32 : i32, i32
  }
  func.func @transform_1(%arg0: i32) -> (i32, i32) {
    %c0_i32 = arith.constant 0 : i32
    %c0_i32_0 = arith.constant 0 : i32
    %c0_i32_1 = arith.constant 0 : i32
    return %c0_i32, %c0_i32_0 : i32, i32
  }
  func.func @transform_2(%arg0: i32) -> (i32, i32) {
    %c0_i32 = arith.constant 0 : i32
    %c0_i32_0 = arith.constant 0 : i32
    %c0_i32_1 = arith.constant 0 : i32
    return %c0_i32, %c0_i32_0 : i32, i32
  }
  func.func @transform_3(%arg0: i32) -> (i32, i32, i32) {
    %c0_i32 = arith.constant 0 : i32
    %c0_i32_0 = arith.constant 0 : i32
    %c0_i32_1 = arith.constant 0 : i32
    %c0_i32_2 = arith.constant 0 : i32
    return %c0_i32, %c0_i32_0, %c0_i32_1 : i32, i32, i32
  }
  func.func @transform_4(%arg0: i32) -> (i32, i32, i32) {
    %c0_i32 = arith.constant 0 : i32
    %c0_i32_0 = arith.constant 0 : i32
    %c0_i32_1 = arith.constant 0 : i32
    %c0_i32_2 = arith.constant 0 : i32
    return %c0_i32, %c0_i32_0, %c0_i32_1 : i32, i32, i32
  }
  func.func @transform_5(%arg0: i32) -> (i32, i32, i32) {
    %c0_i32 = arith.constant 0 : i32
    %c0_i32_0 = arith.constant 0 : i32
    %c0_i32_1 = arith.constant 0 : i32
    %c0_i32_2 = arith.constant 0 : i32
    return %c0_i32, %c0_i32_0, %c0_i32_1 : i32, i32, i32
  }
  func.func @transform_6(%arg0: i32) -> (i32, i32, i32) {
    %c0_i32 = arith.constant 0 : i32
    %c0_i32_0 = arith.constant 0 : i32
    %c0_i32_1 = arith.constant 0 : i32
    %c0_i32_2 = arith.constant 0 : i32
    return %c0_i32, %c0_i32_0, %c0_i32_1 : i32, i32, i32
  }
  func.func @transform_7(%arg0: i32) -> (i32, i32, i32) {
    %c0_i32 = arith.constant 0 : i32
    %c0_i32_0 = arith.constant 0 : i32
    %c0_i32_1 = arith.constant 0 : i32
    %c0_i32_2 = arith.constant 0 : i32
    return %c0_i32, %c0_i32_0, %c0_i32_1 : i32, i32, i32
  }
  func.func @transform_8(%arg0: i32) -> (i32, i32) {
    %c0_i32 = arith.constant 0 : i32
    %c0_i32_0 = arith.constant 0 : i32
    %c0_i32_1 = arith.constant 0 : i32
    return %c0_i32, %c0_i32_0 : i32, i32
  }
  func.func @transform_9(%arg0: i32) -> (i32, i32) {
    %c0_i32 = arith.constant 0 : i32
    %c0_i32_0 = arith.constant 0 : i32
    %c0_i32_1 = arith.constant 0 : i32
    return %c0_i32, %c0_i32_0 : i32, i32
  }
  func.func @transform_10(%arg0: i32) -> (i32, i32) {
    %c0_i32 = arith.constant 0 : i32
    %c0_i32_0 = arith.constant 0 : i32
    return %arg0, %c0_i32 : i32, i32
  }
}

</mosaic_0001>

<llo_original>
// kernel: tpu_custom_call.1
$region0: #{tpu_custom_call.1}
  #allocation0 [shape = 'u32[]', space=smem, size = 0x4, offset = 0x4, fixed_abs, tag = 'smem constant byte address 0x4 - core index']
  #allocation1 [shape = 'u32[144,128]{1,0:T(1,128)}', space=vmem, size = 0x12000, scoped, tag = 'internal scratch']
  %s0 = inlined_call_operand.vmem [shape: bf16[8,16], index: 0, kind: input, shape index: {}]
  %s1 = inlined_call_operand.vmem [shape: bf16[16,32], index: 1, kind: input, shape index: {}]
  %s2 = inlined_call_operand.vmem [shape: f32[1,32], index: 2, kind: input, shape index: {}]
  %s3 = inlined_call_operand.vmem [shape: bf16[3,32,32], index: 3, kind: input, shape index: {}]
  %s4 = inlined_call_operand.vmem [shape: bf16[3,32,128], index: 4, kind: input, shape index: {}]
  %s5 = inlined_call_operand.vmem [shape: bf16[3,128,32], index: 5, kind: input, shape index: {}]
  %s6 = inlined_call_operand.vmem [shape: f32[3,6,32], index: 6, kind: input, shape index: {}]
  %s7 = inlined_call_operand.vmem [shape: f32[3,1,128], index: 7, kind: input, shape index: {}]
  %s8 = inlined_call_operand.vmem [shape: bf16[32,128], index: 8, kind: input, shape index: {}]
  %s9 = inlined_call_operand.vmem [shape: f32[1,128], index: 9, kind: input, shape index: {}]
  %s10 = inlined_call_operand.hbm [shape: f32[8,128], index: 10, kind: output, shape index: {}]
  %s11 = sld [smem:[#allocation0]]
  $region50: #{tpu_custom_call.1} parent=0
    _
  %s13 = ssub.s32 1, %s11
  %s14 = scalar_select 0, %s13, %s11
  $region1: #{tpu_custom_call.1} parent=0
    #allocation2 [shape = 'u8[4096]{0}', space=vmem, size = 0x1000, scoped, tag = 'output window, operand 0, single buffered']
    #allocation3 [shape = 's32[1]{0}', space=sflag, size = 0x4, scoped, tag = 'scoped memory for tpu_custom_call.1']
    %15 = vsyncpa [#allocation3], 0
    // Predicated region
    $region2: #{tpu_custom_call.1} parent=1 // pred_check
      _
    $region3: #{tpu_custom_call.1} parent=1 // pred_check_branch
      %17 = sbr.rel (0) target = $region5
    $region4: #{tpu_custom_call.1} parent=1 // pred_region
      _
    $region5: #{tpu_custom_call.1} parent=1 // pred_fallthru
      _
    // Predicated region
    $region6: #{tpu_custom_call.1} parent=1 // pred_check
      _
    $region7: #{tpu_custom_call.1} parent=1 // pred_check_branch
      %19 = sbr.rel (0) target = $region9
    $region8: #{tpu_custom_call.1} parent=1 // pred_region
      _
    $region9: #{tpu_custom_call.1} parent=1 // pred_fallthru
      _
    // Predicated region
    $region10: #{tpu_custom_call.1} parent=1 // pred_check
      _
    $region11: #{tpu_custom_call.1} parent=1 // pred_check_branch
      %21 = sbr.rel (0) target = $region13
    $region12: #{tpu_custom_call.1} parent=1 // pred_region
      _
    $region13: #{tpu_custom_call.1} parent=1 // pred_fallthru
      _
    // Predicated region
    $region14: #{tpu_custom_call.1} parent=1 // pred_check
      _
    $region15: #{tpu_custom_call.1} parent=1 // pred_check_branch
      %23 = sbr.rel (0) target = $region17
    $region16: #{tpu_custom_call.1} parent=1 // pred_region
      _
    $region17: #{tpu_custom_call.1} parent=1 // pred_fallthru
      _
    // Predicated region
    $region18: #{tpu_custom_call.1} parent=1 // pred_check
      _
    $region19: #{tpu_custom_call.1} parent=1 // pred_check_branch
      %25 = sbr.rel (0) target = $region21
    $region20: #{tpu_custom_call.1} parent=1 // pred_region
      _
    $region21: #{tpu_custom_call.1} parent=1 // pred_fallthru
      _
    // Predicated region
    $region22: #{tpu_custom_call.1} parent=1 // pred_check
      _
    $region23: #{tpu_custom_call.1} parent=1 // pred_check_branch
      %27 = sbr.rel (0) target = $region25
    $region24: #{tpu_custom_call.1} parent=1 // pred_region
      _
    $region25: #{tpu_custom_call.1} parent=1 // pred_fallthru
      _
    // Predicated region
    $region26: #{tpu_custom_call.1} parent=1 // pred_check
      _
    $region27: #{tpu_custom_call.1} parent=1 // pred_check_branch
      %29 = sbr.rel (0) target = $region29
    $region28: #{tpu_custom_call.1} parent=1 // pred_region
      _
    $region29: #{tpu_custom_call.1} parent=1 // pred_fallthru
      _
    // Predicated region
    $region30: #{tpu_custom_call.1} parent=1 // pred_check
      _
    $region31: #{tpu_custom_call.1} parent=1 // pred_check_branch
      %31 = sbr.rel (0) target = $region33
    $region32: #{tpu_custom_call.1} parent=1 // pred_region
      _
    $region33: #{tpu_custom_call.1} parent=1 // pred_fallthru
      _
    // Predicated region
    $region34: #{tpu_custom_call.1} parent=1 // pred_check
      _
    $region35: #{tpu_custom_call.1} parent=1 // pred_check_branch
      %33 = sbr.rel (0) target = $region37
    $region36: #{tpu_custom_call.1} parent=1 // pred_region
      _
    $region37: #{tpu_custom_call.1} parent=1 // pred_fallthru
      _
    // Predicated region
    $region38: #{tpu_custom_call.1} parent=1 // pred_check
      _
    $region39: #{tpu_custom_call.1} parent=1 // pred_check_branch
      %35 = sbr.rel (0) target = $region41
    $region40: #{tpu_custom_call.1} parent=1 // pred_region
      _
    $region41: #{tpu_custom_call.1} parent=1 // pred_fallthru
      _
    %v37 = vld [vmem:[%s0] sm:$0xf]
    %v38 = vld [vmem:[%s1] sm:$0xf]
    %v39 = vld [vmem:[%s1 + $0x4] sm:$0xf]
    %v40 = vld [vmem:[%s2] sm:$0x1]
    %v42 = vlaneseq
    %v43 = vshrl.u32 %v42, 7
    %v44 = vsub.s32 0, %v43
    %v45 = vrot.slane %v40, %v44
    %v49 = vunpack.c.l.b16 %v38
    %v50 = vunpack.c.l.b16 %v39
    %v51 = vpack.c.b16 %v50, %v49
    %vm53 = vcmask 130048
    %v55 = vsel %vm53, %v37, 0
    %57 = vmatprep.subr.bf16.mxu0 0
    %58 = vmatpush1.bf16.msra.mxu0 %v51
    %59 = vmatprep.subr.bf16.mxu0 0
    %60 = vmatpush1.bf16.msra.mxu0 0
    %61 = vmatprep.subr.bf16.mxu0 0
    %62 = vmatpush1.bf16.msra.mxu0 0
    %63 = vmatprep.subr.bf16.mxu0 0
    %64 = vmatpush1.bf16.msra.mxu0 0
    %65 = vmatprep.subr.bf16.mxu0 0
    %66 = vmatpush1.bf16.msra.mxu0 0
    %67 = vmatprep.subr.bf16.mxu0 0
    %68 = vmatpush1.bf16.msra.mxu0 0
    %69 = vmatprep.subr.bf16.mxu0 0
    %70 = vmatpush1.bf16.msra.mxu0 0
    %71 = vmatprep.subr.bf16.mxu0 0
    %72 = vmatpush1.bf16.msra.mxu0 0
    %73 = vmatprep.subr.bf16.mxu0 0
    %74 = vmatpush1.bf16.msra.mxu0 0
    %75 = vmatprep.subr.bf16.mxu0 0
    %76 = vmatpush1.bf16.msra.mxu0 0
    %77 = vmatprep.subr.bf16.mxu0 0
    %78 = vmatpush1.bf16.msra.mxu0 0
    %79 = vmatprep.subr.bf16.mxu0 0
    %80 = vmatpush1.bf16.msra.mxu0 0
    %81 = vmatprep.subr.bf16.mxu0 0
    %82 = vmatpush1.bf16.msra.mxu0 0
    %83 = vmatprep.subr.bf16.mxu0 0
    %84 = vmatpush1.bf16.msra.mxu0 0
    %85 = vmatprep.subr.bf16.mxu0 0
    %86 = vmatpush1.bf16.msra.mxu0 0
    %87 = vmatprep.subr.bf16.mxu0 0
    %88 = vmatpush1.bf16.msra.mxu0 0
    %89 = vmatprep.mubr.bf16.mxu0 0
    %90 = vmatmul.mubr.bf16.gmra.mrb[0].mxu0 %v55
    %v91 = vpop.f32.mrb[0].mxu0
    %v92 = vadd.f32 %v45, %v91
    %v93 = vpop.f32.mrb[0].mxu0
    %v94 = vpop.f32.mrb[0].mxu0
    %v95 = vpop.f32.mrb[0].mxu0
    %96 = vdwg.mxu0
    %v97 = vld [vmem:[%s3] sm:$0xf]
    %v98 = vld [vmem:[%s3 + $0x4] sm:$0xf]
    %v99 = vld [vmem:[%s3 + $0x8] sm:$0xf]
    %v100 = vld [vmem:[%s3 + $0xc] sm:$0xf]
    %v101 = vld [vmem:[%s4] sm:$0xf]
    %v102 = vld [vmem:[%s4 + $0x4] sm:$0xf]
    %v103 = vld [vmem:[%s4 + $0x8] sm:$0xf]
    %v104 = vld [vmem:[%s4 + $0xc] sm:$0xf]
    %v105 = vld [vmem:[%s5] sm:$0xf]
    %v106 = vld [vmem:[%s5 + $0x4] sm:$0xf]
    %v107 = vld [vmem:[%s5 + $0x8] sm:$0xf]
    %v108 = vld [vmem:[%s5 + $0xc] sm:$0xf]
    %v109 = vld [vmem:[%s5 + $0x10] sm:$0xf]
    %v110 = vld [vmem:[%s5 + $0x14] sm:$0xf]
    %v111 = vld [vmem:[%s5 + $0x18] sm:$0xf]
    %v112 = vld [vmem:[%s5 + $0x1c] sm:$0xf]
    %v113 = vld [vmem:[%s5 + $0x20] sm:$0xf]
    %v114 = vld [vmem:[%s5 + $0x24] sm:$0xf]
    %v115 = vld [vmem:[%s5 + $0x28] sm:$0xf]
    %v116 = vld [vmem:[%s5 + $0x2c] sm:$0xf]
    %v117 = vld [vmem:[%s5 + $0x30] sm:$0xf]
    %v118 = vld [vmem:[%s5 + $0x34] sm:$0xf]
    %v119 = vld [vmem:[%s5 + $0x38] sm:$0xf]
    %v120 = vld [vmem:[%s5 + $0x3c] sm:$0xf]
    %v121 = vld [vmem:[%s6] sm:$0x3f]
    %v122 = vld [vmem:[%s7] sm:$0x1]
    %v123 = vpack.c.bf16 %v92, %v92
    %v124 = vlaneseq
    %v125 = vshrl.u32 %v124, 7
    %v126 = vsub.s32 0, %v125
    %v127 = vrot.slane %v121, %v126
    %v132 = vunpack.c.l.b16 %v97
    %v133 = vunpack.c.l.b16 %v98
    %v134 = vunpack.c.l.b16 %v99
    %v135 = vunpack.c.l.b16 %v100
    %v136 = vpack.c.b16 %v133, %v132
    %v137 = vpack.c.b16 %v135, %v134
    %vm140 = vcmask 261120
    %v142 = vsel %vm140, %v123, 0
    %144 = vmatprep.subr.bf16.mxu0 0
    %145 = vmatpush1.bf16.msra.mxu0 %v136
    %146 = vmatprep.subr.bf16.mxu0 0
    %147 = vmatpush1.bf16.msra.mxu0 %v137
    %148 = vmatprep.subr.bf16.mxu0 0
    %149 = vmatpush1.bf16.msra.mxu0 0
    %150 = vmatprep.subr.bf16.mxu0 0
    %151 = vmatpush1.bf16.msra.mxu0 0
    %152 = vmatprep.subr.bf16.mxu0 0
    %153 = vmatpush1.bf16.msra.mxu0 0
    %154 = vmatprep.subr.bf16.mxu0 0
    %155 = vmatpush1.bf16.msra.mxu0 0
    %156 = vmatprep.subr.bf16.mxu0 0
    %157 = vmatpush1.bf16.msra.mxu0 0
    %158 = vmatprep.subr.bf16.mxu0 0
    %159 = vmatpush1.bf16.msra.mxu0 0
    %160 = vmatprep.subr.bf16.mxu0 0
    %161 = vmatpush1.bf16.msra.mxu0 0
    %162 = vmatprep.subr.bf16.mxu0 0
    %163 = vmatpush1.bf16.msra.mxu0 0
    %164 = vmatprep.subr.bf16.mxu0 0
    %165 = vmatpush1.bf16.msra.mxu0 0
    %166 = vmatprep.subr.bf16.mxu0 0
    %167 = vmatpush1.bf16.msra.mxu0 0
    %168 = vmatprep.subr.bf16.mxu0 0
    %169 = vmatpush1.bf16.msra.mxu0 0
    %170 = vmatprep.subr.bf16.mxu0 0
    %171 = vmatpush1.bf16.msra.mxu0 0
    %172 = vmatprep.subr.bf16.mxu0 0
    %173 = vmatpush1.bf16.msra.mxu0 0
    %174 = vmatprep.subr.bf16.mxu0 0
    %175 = vmatpush1.bf16.msra.mxu0 0
    %176 = vmatprep.mubr.bf16.mxu0 0
    %177 = vmatmul.mubr.bf16.gmra.mrb[0].mxu0 %v142
    %v178 = vpop.f32.mrb[0].mxu0
    %v179 = vadd.f32 %v127, %v178
    %v180 = vpop.f32.mrb[0].mxu0
    %v181 = vpop.f32.mrb[0].mxu0
    %v182 = vpop.f32.mrb[0].mxu0
    %183 = vdwg.mxu0
    %v184 = vadd.f32 %v92, %v179
    %v185 = vsel %vm140, %v184, 0.0
    %186 = vadd.xlane.f32.xlu0 %v185
    %v187 = vpop.xlane.xlu0 %186
    %v188 = vrcp.pop 32.0
    %v189 = vmul.f32 %v187, %v188
    %v190 = vsub.f32 %v184, %v189
    %v191 = vmul.f32 %v190, %v190
    %v192 = vsel %vm140, %v191, 0.0
    %193 = vadd.xlane.f32.xlu0 %v192
    %v194 = vpop.xlane.xlu0 %193
    %v195 = vmul.f32 %v194, %v188
    %v196 = vadd.f32 %v195, 1e-05
    %v197 = vrsqrt.pop %v196
    %v198 = vmul.f32 %v190, %v197
    %v199 = vlaneseq
    %v200 = vshrl.u32 %v199, 7
    %v201 = vsub.s32 1, %v200
    %v202 = vrot.slane %v121, %v201
    %v203 = vmul.f32 %v198, %v202
    %v204 = vlaneseq
    %v205 = vshrl.u32 %v204, 7
    %v206 = vsub.s32 2, %v205
    %v207 = vrot.slane %v121, %v206
    %v208 = vadd.f32 %v203, %v207
    %v209 = vpack.c.bf16 %v208, %v208
    %v211 = vlaneseq
    %v212 = vshrl.u32 %v211, 7
    %v213 = vsub.s32 0, %v212
    %v214 = vrot.slane %v122, %v213
    %v220 = vunpack.c.l.b16 %v101
    %v221 = vunpack.c.l.b16 %v102
    %v222 = vunpack.c.l.b16 %v103
    %v223 = vunpack.c.l.b16 %v104
    %v224 = vpack.c.b16 %v221, %v220
    %v225 = vpack.c.b16 %v223, %v222
    %v229 = vsel %vm140, %v209, 0
    %231 = vmatprep.subr.bf16.mxu0 0
    %232 = vmatpush1.bf16.msra.mxu0 %v224
    %233 = vmatprep.subr.bf16.mxu0 0
    %234 = vmatpush1.bf16.msra.mxu0 %v225
    %235 = vmatprep.subr.bf16.mxu0 0
    %236 = vmatpush1.bf16.msra.mxu0 0
    %237 = vmatprep.subr.bf16.mxu0 0
    %238 = vmatpush1.bf16.msra.mxu0 0
    %239 = vmatprep.subr.bf16.mxu0 0
    %240 = vmatpush1.bf16.msra.mxu0 0
    %241 = vmatprep.subr.bf16.mxu0 0
    %242 = vmatpush1.bf16.msra.mxu0 0
    %243 = vmatprep.subr.bf16.mxu0 0
    %244 = vmatpush1.bf16.msra.mxu0 0
    %245 = vmatprep.subr.bf16.mxu0 0
    %246 = vmatpush1.bf16.msra.mxu0 0
    %247 = vmatprep.subr.bf16.mxu0 0
    %248 = vmatpush1.bf16.msra.mxu0 0
    %249 = vmatprep.subr.bf16.mxu0 0
    %250 = vmatpush1.bf16.msra.mxu0 0
    %251 = vmatprep.subr.bf16.mxu0 0
    %252 = vmatpush1.bf16.msra.mxu0 0
    %253 = vmatprep.subr.bf16.mxu0 0
    %254 = vmatpush1.bf16.msra.mxu0 0
    %255 = vmatprep.subr.bf16.mxu0 0
    %256 = vmatpush1.bf16.msra.mxu0 0
    %257 = vmatprep.subr.bf16.mxu0 0
    %258 = vmatpush1.bf16.msra.mxu0 0
    %259 = vmatprep.subr.bf16.mxu0 0
    %260 = vmatpush1.bf16.msra.mxu0 0
    %261 = vmatprep.subr.bf16.mxu0 0
    %262 = vmatpush1.bf16.msra.mxu0 0
    %263 = vmatprep.mubr.bf16.mxu0 0
    %264 = vmatmul.mubr.bf16.gmra.mrb[0].mxu0 %v229
    %v265 = vpop.f32.mrb[0].mxu0
    %v266 = vadd.f32 %v214, %v265
    %v267 = vpop.f32.mrb[0].mxu0
    %v268 = vpop.f32.mrb[0].mxu0
    %v269 = vpop.f32.mrb[0].mxu0
    %270 = vdwg.mxu0
    %v271 = vmax.f32 %v266, 0.0
    %v272 = vpack.c.bf16 %v271, %v271
    %v273 = vlaneseq
    %v274 = vshrl.u32 %v273, 7
    %v275 = vsub.s32 3, %v274
    %v276 = vrot.slane %v121, %v275
    %v293 = vunpack.c.l.b16 %v105
    %v294 = vunpack.c.l.b16 %v106
    %v295 = vunpack.c.l.b16 %v107
    %v296 = vunpack.c.l.b16 %v108
    %v297 = vunpack.c.l.b16 %v109
    %v298 = vunpack.c.l.b16 %v110
    %v299 = vunpack.c.l.b16 %v111
    %v300 = vunpack.c.l.b16 %v112
    %v301 = vunpack.c.l.b16 %v113
    %v302 = vunpack.c.l.b16 %v114
    %v303 = vunpack.c.l.b16 %v115
    %v304 = vunpack.c.l.b16 %v116
    %v305 = vunpack.c.l.b16 %v117
    %v306 = vunpack.c.l.b16 %v118
    %v307 = vunpack.c.l.b16 %v119
    %v308 = vunpack.c.l.b16 %v120
    %v309 = vpack.c.b16 %v294, %v293
    %v310 = vpack.c.b16 %v296, %v295
    %v311 = vpack.c.b16 %v298, %v297
    %v312 = vpack.c.b16 %v300, %v299
    %v313 = vpack.c.b16 %v302, %v301
    %v314 = vpack.c.b16 %v304, %v303
    %v315 = vpack.c.b16 %v306, %v305
    %v316 = vpack.c.b16 %v308, %v307
    %325 = vmatprep.subr.bf16.mxu0 0
    %326 = vmatpush1.bf16.msra.mxu0 %v309
    %327 = vmatprep.subr.bf16.mxu0 0
    %328 = vmatpush1.bf16.msra.mxu0 %v310
    %329 = vmatprep.subr.bf16.mxu0 0
    %330 = vmatpush1.bf16.msra.mxu0 %v311
    %331 = vmatprep.subr.bf16.mxu0 0
    %332 = vmatpush1.bf16.msra.mxu0 %v312
    %333 = vmatprep.subr.bf16.mxu0 0
    %334 = vmatpush1.bf16.msra.mxu0 %v313
    %335 = vmatprep.subr.bf16.mxu0 0
    %336 = vmatpush1.bf16.msra.mxu0 %v314
    %337 = vmatprep.subr.bf16.mxu0 0
    %338 = vmatpush1.bf16.msra.mxu0 %v315
    %339 = vmatprep.subr.bf16.mxu0 0
    %340 = vmatpush1.bf16.msra.mxu0 %v316
    %341 = vmatprep.subr.bf16.mxu0 0
    %342 = vmatpush1.bf16.msra.mxu0 0
    %343 = vmatprep.subr.bf16.mxu0 0
    %344 = vmatpush1.bf16.msra.mxu0 0
    %345 = vmatprep.subr.bf16.mxu0 0
    %346 = vmatpush1.bf16.msra.mxu0 0
    %347 = vmatprep.subr.bf16.mxu0 0
    %348 = vmatpush1.bf16.msra.mxu0 0
    %349 = vmatprep.subr.bf16.mxu0 0
    %350 = vmatpush1.bf16.msra.mxu0 0
    %351 = vmatprep.subr.bf16.mxu0 0
    %352 = vmatpush1.bf16.msra.mxu0 0
    %353 = vmatprep.subr.bf16.mxu0 0
    %354 = vmatpush1.bf16.msra.mxu0 0
    %355 = vmatprep.subr.bf16.mxu0 0
    %356 = vmatpush1.bf16.msra.mxu0 0
    %357 = vmatprep.mubr.bf16.mxu0 0
    %358 = vmatmul.mubr.bf16.gmra.mrb[0].mxu0 %v272
    %v359 = vpop.f32.mrb[0].mxu0
    %v360 = vadd.f32 %v276, %v359
    %v361 = vpop.f32.mrb[0].mxu0
    %v362 = vpop.f32.mrb[0].mxu0
    %v363 = vpop.f32.mrb[0].mxu0
    %364 = vdwg.mxu0
    %v365 = vadd.f32 %v208, %v360
    %v366 = vsel %vm140, %v365, 0.0
    %367 = vadd.xlane.f32.xlu0 %v366
    %v368 = vpop.xlane.xlu0 %367
    %v369 = vmul.f32 %v368, %v188
    %v370 = vsub.f32 %v365, %v369
    %v371 = vmul.f32 %v370, %v370
    %v372 = vsel %vm140, %v371, 0.0
    %373 = vadd.xlane.f32.xlu0 %v372
    %v374 = vpop.xlane.xlu0 %373
    %v375 = vmul.f32 %v374, %v188
    %v376 = vadd.f32 %v375, 1e-05
    %v377 = vrsqrt.pop %v376
    %v378 = vmul.f32 %v370, %v377
    %v379 = vlaneseq
    %v380 = vshrl.u32 %v379, 7
    %v381 = vsub.s32 4, %v380
    %v382 = vrot.slane %v121, %v381
    %v383 = vmul.f32 %v378, %v382
    %v384 = vlaneseq
    %v385 = vshrl.u32 %v384, 7
    %v386 = vsub.s32 5, %v385
    %v387 = vrot.slane %v121, %v386
    %v388 = vadd.f32 %v383, %v387
    %s389 = scalar_lea.vmem %s3, 16
    %v390 = vld [vmem:[%s389] sm:$0xf]
    %v391 = vld [vmem:[%s389 + $0x4] sm:$0xf]
    %v392 = vld [vmem:[%s389 + $0x8] sm:$0xf]
    %v393 = vld [vmem:[%s389 + $0xc] sm:$0xf]
    %s394 = scalar_lea.vmem %s4, 16
    %v395 = vld [vmem:[%s394] sm:$0xf]
    %v396 = vld [vmem:[%s394 + $0x4] sm:$0xf]
    %v397 = vld [vmem:[%s394 + $0x8] sm:$0xf]
    %v398 = vld [vmem:[%s394 + $0xc] sm:$0xf]
    %s399 = scalar_lea.vmem %s5, 64
    %v400 = vld [vmem:[%s399] sm:$0xf]
    %v401 = vld [vmem:[%s399 + $0x4] sm:$0xf]
    %v402 = vld [vmem:[%s399 + $0x8] sm:$0xf]
    %v403 = vld [vmem:[%s399 + $0xc] sm:$0xf]
    %v404 = vld [vmem:[%s399 + $0x10] sm:$0xf]
    %v405 = vld [vmem:[%s399 + $0x14] sm:$0xf]
    %v406 = vld [vmem:[%s399 + $0x18] sm:$0xf]
    %v407 = vld [vmem:[%s399 + $0x1c] sm:$0xf]
    %v408 = vld [vmem:[%s399 + $0x20] sm:$0xf]
    %v409 = vld [vmem:[%s399 + $0x24] sm:$0xf]
    %v410 = vld [vmem:[%s399 + $0x28] sm:$0xf]
    %v411 = vld [vmem:[%s399 + $0x2c] sm:$0xf]
    %v412 = vld [vmem:[%s399 + $0x30] sm:$0xf]
    %v413 = vld [vmem:[%s399 + $0x34] sm:$0xf]
    %v414 = vld [vmem:[%s399 + $0x38] sm:$0xf]
    %v415 = vld [vmem:[%s399 + $0x3c] sm:$0xf]
    %s416 = scalar_lea.vmem %s6, 8
    %v417 = vld [vmem:[%s416] sm:$0x3f]
    %s418 = scalar_lea.vmem %s7, 1
    %v419 = vld [vmem:[%s418] sm:$0x1]
    %v420 = vpack.c.bf16 %v388, %v388
    %v421 = vlaneseq
    %v422 = vshrl.u32 %v421, 7
    %v423 = vsub.s32 0, %v422
    %v424 = vrot.slane %v417, %v423
    %v429 = vunpack.c.l.b16 %v390
    %v430 = vunpack.c.l.b16 %v391
    %v431 = vunpack.c.l.b16 %v392
    %v432 = vunpack.c.l.b16 %v393
    %v433 = vpack.c.b16 %v430, %v429
    %v434 = vpack.c.b16 %v432, %v431
    %v438 = vsel %vm140, %v420, 0
    %440 = vmatprep.subr.bf16.mxu0 0
    %441 = vmatpush1.bf16.msra.mxu0 %v433
    %442 = vmatprep.subr.bf16.mxu0 0
    %443 = vmatpush1.bf16.msra.mxu0 %v434
    %444 = vmatprep.subr.bf16.mxu0 0
    %445 = vmatpush1.bf16.msra.mxu0 0
    %446 = vmatprep.subr.bf16.mxu0 0
    %447 = vmatpush1.bf16.msra.mxu0 0
    %448 = vmatprep.subr.bf16.mxu0 0
    %449 = vmatpush1.bf16.msra.mxu0 0
    %450 = vmatprep.subr.bf16.mxu0 0
    %451 = vmatpush1.bf16.msra.mxu0 0
    %452 = vmatprep.subr.bf16.mxu0 0
    %453 = vmatpush1.bf16.msra.mxu0 0
    %454 = vmatprep.subr.bf16.mxu0 0
    %455 = vmatpush1.bf16.msra.mxu0 0
    %456 = vmatprep.subr.bf16.mxu0 0
    %457 = vmatpush1.bf16.msra.mxu0 0
    %458 = vmatprep.subr.bf16.mxu0 0
    %459 = vmatpush1.bf16.msra.mxu0 0
    %460 = vmatprep.subr.bf16.mxu0 0
    %461 = vmatpush1.bf16.msra.mxu0 0
    %462 = vmatprep.subr.bf16.mxu0 0
    %463 = vmatpush1.bf16.msra.mxu0 0
    %464 = vmatprep.subr.bf16.mxu0 0
    %465 = vmatpush1.bf16.msra.mxu0 0
    %466 = vmatprep.subr.bf16.mxu0 0
    %467 = vmatpush1.bf16.msra.mxu0 0
    %468 = vmatprep.subr.bf16.mxu0 0
    %469 = vmatpush1.bf16.msra.mxu0 0
    %470 = vmatprep.subr.bf16.mxu0 0
    %471 = vmatpush1.bf16.msra.mxu0 0
    %472 = vmatprep.mubr.bf16.mxu0 0
    %473 = vmatmul.mubr.bf16.gmra.mrb[0].mxu0 %v438
    %v474 = vpop.f32.mrb[0].mxu0
    %v475 = vadd.f32 %v424, %v474
    %v476 = vpop.f32.mrb[0].mxu0
    %v477 = vpop.f32.mrb[0].mxu0
    %v478 = vpop.f32.mrb[0].mxu0
    %479 = vdwg.mxu0
    %v480 = vadd.f32 %v388, %v475
    %v481 = vsel %vm140, %v480, 0.0
    %482 = vadd.xlane.f32.xlu0 %v481
    %v483 = vpop.xlane.xlu0 %482
    %v484 = vmul.f32 %v483, %v188
    %v485 = vsub.f32 %v480, %v484
    %v486 = vmul.f32 %v485, %v485
    %v487 = vsel %vm140, %v486, 0.0
    %488 = vadd.xlane.f32.xlu0 %v487
    %v489 = vpop.xlane.xlu0 %488
    %v490 = vmul.f32 %v489, %v188
    %v491 = vadd.f32 %v490, 1e-05
    %v492 = vrsqrt.pop %v491
    %v493 = vmul.f32 %v485, %v492
    %v494 = vlaneseq
    %v495 = vshrl.u32 %v494, 7
    %v496 = vsub.s32 1, %v495
    %v497 = vrot.slane %v417, %v496
    %v498 = vmul.f32 %v493, %v497
    %v499 = vlaneseq
    %v500 = vshrl.u32 %v499, 7
    %v501 = vsub.s32 2, %v500
    %v502 = vrot.slane %v417, %v501
    %v503 = vadd.f32 %v498, %v502
    %v504 = vpack.c.bf16 %v503, %v503
    %v506 = vlaneseq
    %v507 = vshrl.u32 %v506, 7
    %v508 = vsub.s32 0, %v507
    %v509 = vrot.slane %v419, %v508
    %v515 = vunpack.c.l.b16 %v395
    %v516 = vunpack.c.l.b16 %v396
    %v517 = vunpack.c.l.b16 %v397
    %v518 = vunpack.c.l.b16 %v398
    %v519 = vpack.c.b16 %v516, %v515
    %v520 = vpack.c.b16 %v518, %v517
    %v524 = vsel %vm140, %v504, 0
    %526 = vmatprep.subr.bf16.mxu0 0
    %527 = vmatpush1.bf16.msra.mxu0 %v519
    %528 = vmatprep.subr.bf16.mxu0 0
    %529 = vmatpush1.bf16.msra.mxu0 %v520
    %530 = vmatprep.subr.bf16.mxu0 0
    %531 = vmatpush1.bf16.msra.mxu0 0
    %532 = vmatprep.subr.bf16.mxu0 0
    %533 = vmatpush1.bf16.msra.mxu0 0
    %534 = vmatprep.subr.bf16.mxu0 0
    %535 = vmatpush1.bf16.msra.mxu0 0
    %536 = vmatprep.subr.bf16.mxu0 0
    %537 = vmatpush1.bf16.msra.mxu0 0
    %538 = vmatprep.subr.bf16.mxu0 0
    %539 = vmatpush1.bf16.msra.mxu0 0
    %540 = vmatprep.subr.bf16.mxu0 0
    %541 = vmatpush1.bf16.msra.mxu0 0
    %542 = vmatprep.subr.bf16.mxu0 0
    %543 = vmatpush1.bf16.msra.mxu0 0
    %544 = vmatprep.subr.bf16.mxu0 0
    %545 = vmatpush1.bf16.msra.mxu0 0
    %546 = vmatprep.subr.bf16.mxu0 0
    %547 = vmatpush1.bf16.msra.mxu0 0
    %548 = vmatprep.subr.bf16.mxu0 0
    %549 = vmatpush1.bf16.msra.mxu0 0
    %550 = vmatprep.subr.bf16.mxu0 0
    %551 = vmatpush1.bf16.msra.mxu0 0
    %552 = vmatprep.subr.bf16.mxu0 0
    %553 = vmatpush1.bf16.msra.mxu0 0
    %554 = vmatprep.subr.bf16.mxu0 0
    %555 = vmatpush1.bf16.msra.mxu0 0
    %556 = vmatprep.subr.bf16.mxu0 0
    %557 = vmatpush1.bf16.msra.mxu0 0
    %558 = vmatprep.mubr.bf16.mxu0 0
    %559 = vmatmul.mubr.bf16.gmra.mrb[0].mxu0 %v524
    %v560 = vpop.f32.mrb[0].mxu0
    %v561 = vadd.f32 %v509, %v560
    %v562 = vpop.f32.mrb[0].mxu0
    %v563 = vpop.f32.mrb[0].mxu0
    %v564 = vpop.f32.mrb[0].mxu0
    %565 = vdwg.mxu0
    %v566 = vmax.f32 %v561, 0.0
    %v567 = vpack.c.bf16 %v566, %v566
    %v568 = vlaneseq
    %v569 = vshrl.u32 %v568, 7
    %v570 = vsub.s32 3, %v569
    %v571 = vrot.slane %v417, %v570
    %v588 = vunpack.c.l.b16 %v400
    %v589 = vunpack.c.l.b16 %v401
    %v590 = vunpack.c.l.b16 %v402
    %v591 = vunpack.c.l.b16 %v403
    %v592 = vunpack.c.l.b16 %v404
    %v593 = vunpack.c.l.b16 %v405
    %v594 = vunpack.c.l.b16 %v406
    %v595 = vunpack.c.l.b16 %v407
    %v596 = vunpack.c.l.b16 %v408
    %v597 = vunpack.c.l.b16 %v409
    %v598 = vunpack.c.l.b16 %v410
    %v599 = vunpack.c.l.b16 %v411
    %v600 = vunpack.c.l.b16 %v412
    %v601 = vunpack.c.l.b16 %v413
    %v602 = vunpack.c.l.b16 %v414
    %v603 = vunpack.c.l.b16 %v415
    %v604 = vpack.c.b16 %v589, %v588
    %v605 = vpack.c.b16 %v591, %v590
    %v606 = vpack.c.b16 %v593, %v592
    %v607 = vpack.c.b16 %v595, %v594
    %v608 = vpack.c.b16 %v597, %v596
    %v609 = vpack.c.b16 %v599, %v598
    %v610 = vpack.c.b16 %v601, %v600
    %v611 = vpack.c.b16 %v603, %v602
    %620 = vmatprep.subr.bf16.mxu0 0
    %621 = vmatpush1.bf16.msra.mxu0 %v604
    %622 = vmatprep.subr.bf16.mxu0 0
    %623 = vmatpush1.bf16.msra.mxu0 %v605
    %624 = vmatprep.subr.bf16.mxu0 0
    %625 = vmatpush1.bf16.msra.mxu0 %v606
    %626 = vmatprep.subr.bf16.mxu0 0
    %627 = vmatpush1.bf16.msra.mxu0 %v607
    %628 = vmatprep.subr.bf16.mxu0 0
    %629 = vmatpush1.bf16.msra.mxu0 %v608
    %630 = vmatprep.subr.bf16.mxu0 0
    %631 = vmatpush1.bf16.msra.mxu0 %v609
    %632 = vmatprep.subr.bf16.mxu0 0
    %633 = vmatpush1.bf16.msra.mxu0 %v610
    %634 = vmatprep.subr.bf16.mxu0 0
    %635 = vmatpush1.bf16.msra.mxu0 %v611
    %636 = vmatprep.subr.bf16.mxu0 0
    %637 = vmatpush1.bf16.msra.mxu0 0
    %638 = vmatprep.subr.bf16.mxu0 0
    %639 = vmatpush1.bf16.msra.mxu0 0
    %640 = vmatprep.subr.bf16.mxu0 0
    %641 = vmatpush1.bf16.msra.mxu0 0
    %642 = vmatprep.subr.bf16.mxu0 0
    %643 = vmatpush1.bf16.msra.mxu0 0
    %644 = vmatprep.subr.bf16.mxu0 0
    %645 = vmatpush1.bf16.msra.mxu0 0
    %646 = vmatprep.subr.bf16.mxu0 0
    %647 = vmatpush1.bf16.msra.mxu0 0
    %648 = vmatprep.subr.bf16.mxu0 0
    %649 = vmatpush1.bf16.msra.mxu0 0
    %650 = vmatprep.subr.bf16.mxu0 0
    %651 = vmatpush1.bf16.msra.mxu0 0
    %652 = vmatprep.mubr.bf16.mxu0 0
    %653 = vmatmul.mubr.bf16.gmra.mrb[0].mxu0 %v567
    %v654 = vpop.f32.mrb[0].mxu0
    %v655 = vadd.f32 %v571, %v654
    %v656 = vpop.f32.mrb[0].mxu0
    %v657 = vpop.f32.mrb[0].mxu0
    %v658 = vpop.f32.mrb[0].mxu0
    %659 = vdwg.mxu0
    %v660 = vadd.f32 %v503, %v655
    %v661 = vsel %vm140, %v660, 0.0
    %662 = vadd.xlane.f32.xlu0 %v661
    %v663 = vpop.xlane.xlu0 %662
    %v664 = vmul.f32 %v663, %v188
    %v665 = vsub.f32 %v660, %v664
    %v666 = vmul.f32 %v665, %v665
    %v667 = vsel %vm140, %v666, 0.0
    %668 = vadd.xlane.f32.xlu0 %v667
    %v669 = vpop.xlane.xlu0 %668
    %v670 = vmul.f32 %v669, %v188
    %v671 = vadd.f32 %v670, 1e-05
    %v672 = vrsqrt.pop %v671
    %v673 = vmul.f32 %v665, %v672
    %v674 = vlaneseq
    %v675 = vshrl.u32 %v674, 7
    %v676 = vsub.s32 4, %v675
    %v677 = vrot.slane %v417, %v676
    %v678 = vmul.f32 %v673, %v677
    %v679 = vlaneseq
    %v680 = vshrl.u32 %v679, 7
    %v681 = vsub.s32 5, %v680
    %v682 = vrot.slane %v417, %v681
    %v683 = vadd.f32 %v678, %v682
    %s684 = scalar_lea.vmem %s3, 32
    %v685 = vld [vmem:[%s684] sm:$0xf]
    %v686 = vld [vmem:[%s684 + $0x4] sm:$0xf]
    %v687 = vld [vmem:[%s684 + $0x8] sm:$0xf]
    %v688 = vld [vmem:[%s684 + $0xc] sm:$0xf]
    %s689 = scalar_lea.vmem %s4, 32
    %v690 = vld [vmem:[%s689] sm:$0xf]
    %v691 = vld [vmem:[%s689 + $0x4] sm:$0xf]
    %v692 = vld [vmem:[%s689 + $0x8] sm:$0xf]
    %v693 = vld [vmem:[%s689 + $0xc] sm:$0xf]
    %s694 = scalar_lea.vmem %s5, 128
    %v695 = vld [vmem:[%s694] sm:$0xf]
    %v696 = vld [vmem:[%s694 + $0x4] sm:$0xf]
    %v697 = vld [vmem:[%s694 + $0x8] sm:$0xf]
    %v698 = vld [vmem:[%s694 + $0xc] sm:$0xf]
    %v699 = vld [vmem:[%s694 + $0x10] sm:$0xf]
    %v700 = vld [vmem:[%s694 + $0x14] sm:$0xf]
    %v701 = vld [vmem:[%s694 + $0x18] sm:$0xf]
    %v702 = vld [vmem:[%s694 + $0x1c] sm:$0xf]
    %v703 = vld [vmem:[%s694 + $0x20] sm:$0xf]
    %v704 = vld [vmem:[%s694 + $0x24] sm:$0xf]
    %v705 = vld [vmem:[%s694 + $0x28] sm:$0xf]
    %v706 = vld [vmem:[%s694 + $0x2c] sm:$0xf]
    %v707 = vld [vmem:[%s694 + $0x30] sm:$0xf]
    %v708 = vld [vmem:[%s694 + $0x34] sm:$0xf]
    %v709 = vld [vmem:[%s694 + $0x38] sm:$0xf]
    %v710 = vld [vmem:[%s694 + $0x3c] sm:$0xf]
    %s711 = scalar_lea.vmem %s6, 16
    %v712 = vld [vmem:[%s711] sm:$0x3f]
    %s713 = scalar_lea.vmem %s7, 2
    %v714 = vld [vmem:[%s713] sm:$0x1]
    %v715 = vpack.c.bf16 %v683, %v683
    %v716 = vlaneseq
    %v717 = vshrl.u32 %v716, 7
    %v718 = vsub.s32 0, %v717
    %v719 = vrot.slane %v712, %v718
    %v724 = vunpack.c.l.b16 %v685
    %v725 = vunpack.c.l.b16 %v686
    %v726 = vunpack.c.l.b16 %v687
    %v727 = vunpack.c.l.b16 %v688
    %v728 = vpack.c.b16 %v725, %v724
    %v729 = vpack.c.b16 %v727, %v726
    %v733 = vsel %vm140, %v715, 0
    %735 = vmatprep.subr.bf16.mxu0 0
    %736 = vmatpush1.bf16.msra.mxu0 %v728
    %737 = vmatprep.subr.bf16.mxu0 0
    %738 = vmatpush1.bf16.msra.mxu0 %v729
    %739 = vmatprep.subr.bf16.mxu0 0
    %740 = vmatpush1.bf16.msra.mxu0 0
    %741 = vmatprep.subr.bf16.mxu0 0
    %742 = vmatpush1.bf16.msra.mxu0 0
    %743 = vmatprep.subr.bf16.mxu0 0
    %744 = vmatpush1.bf16.msra.mxu0 0
    %745 = vmatprep.subr.bf16.mxu0 0
    %746 = vmatpush1.bf16.msra.mxu0 0
    %747 = vmatprep.subr.bf16.mxu0 0
    %748 = vmatpush1.bf16.msra.mxu0 0
    %749 = vmatprep.subr.bf16.mxu0 0
    %750 = vmatpush1.bf16.msra.mxu0 0
    %751 = vmatprep.subr.bf16.mxu0 0
    %752 = vmatpush1.bf16.msra.mxu0 0
    %753 = vmatprep.subr.bf16.mxu0 0
    %754 = vmatpush1.bf16.msra.mxu0 0
    %755 = vmatprep.subr.bf16.mxu0 0
    %756 = vmatpush1.bf16.msra.mxu0 0
    %757 = vmatprep.subr.bf16.mxu0 0
    %758 = vmatpush1.bf16.msra.mxu0 0
    %759 = vmatprep.subr.bf16.mxu0 0
    %760 = vmatpush1.bf16.msra.mxu0 0
    %761 = vmatprep.subr.bf16.mxu0 0
    %762 = vmatpush1.bf16.msra.mxu0 0
    %763 = vmatprep.subr.bf16.mxu0 0
    %764 = vmatpush1.bf16.msra.mxu0 0
    %765 = vmatprep.subr.bf16.mxu0 0
    %766 = vmatpush1.bf16.msra.mxu0 0
    %767 = vmatprep.mubr.bf16.mxu0 0
    %768 = vmatmul.mubr.bf16.gmra.mrb[0].mxu0 %v733
    %v769 = vpop.f32.mrb[0].mxu0
    %v770 = vadd.f32 %v719, %v769
    %v771 = vpop.f32.mrb[0].mxu0
    %v772 = vpop.f32.mrb[0].mxu0
    %v773 = vpop.f32.mrb[0].mxu0
    %774 = vdwg.mxu0
    %v775 = vadd.f32 %v683, %v770
    %v776 = vsel %vm140, %v775, 0.0
    %777 = vadd.xlane.f32.xlu0 %v776
    %v778 = vpop.xlane.xlu0 %777
    %v779 = vmul.f32 %v778, %v188
    %v780 = vsub.f32 %v775, %v779
    %v781 = vmul.f32 %v780, %v780
    %v782 = vsel %vm140, %v781, 0.0
    %783 = vadd.xlane.f32.xlu0 %v782
    %v784 = vpop.xlane.xlu0 %783
    %v785 = vmul.f32 %v784, %v188
    %v786 = vadd.f32 %v785, 1e-05
    %v787 = vrsqrt.pop %v786
    %v788 = vmul.f32 %v780, %v787
    %v789 = vlaneseq
    %v790 = vshrl.u32 %v789, 7
    %v791 = vsub.s32 1, %v790
    %v792 = vrot.slane %v712, %v791
    %v793 = vmul.f32 %v788, %v792
    %v794 = vlaneseq
    %v795 = vshrl.u32 %v794, 7
    %v796 = vsub.s32 2, %v795
    %v797 = vrot.slane %v712, %v796
    %v798 = vadd.f32 %v793, %v797
    %v799 = vpack.c.bf16 %v798, %v798
    %v801 = vlaneseq
    %v802 = vshrl.u32 %v801, 7
    %v803 = vsub.s32 0, %v802
    %v804 = vrot.slane %v714, %v803
    %v810 = vunpack.c.l.b16 %v690
    %v811 = vunpack.c.l.b16 %v691
    %v812 = vunpack.c.l.b16 %v692
    %v813 = vunpack.c.l.b16 %v693
    %v814 = vpack.c.b16 %v811, %v810
    %v815 = vpack.c.b16 %v813, %v812
    %v819 = vsel %vm140, %v799, 0
    %821 = vmatprep.subr.bf16.mxu0 0
    %822 = vmatpush1.bf16.msra.mxu0 %v814
    %823 = vmatprep.subr.bf16.mxu0 0
    %824 = vmatpush1.bf16.msra.mxu0 %v815
    %825 = vmatprep.subr.bf16.mxu0 0
    %826 = vmatpush1.bf16.msra.mxu0 0
    %827 = vmatprep.subr.bf16.mxu0 0
    %828 = vmatpush1.bf16.msra.mxu0 0
    %829 = vmatprep.subr.bf16.mxu0 0
    %830 = vmatpush1.bf16.msra.mxu0 0
    %831 = vmatprep.subr.bf16.mxu0 0
    %832 = vmatpush1.bf16.msra.mxu0 0
    %833 = vmatprep.subr.bf16.mxu0 0
    %834 = vmatpush1.bf16.msra.mxu0 0
    %835 = vmatprep.subr.bf16.mxu0 0
    %836 = vmatpush1.bf16.msra.mxu0 0
    %837 = vmatprep.subr.bf16.mxu0 0
    %838 = vmatpush1.bf16.msra.mxu0 0
    %839 = vmatprep.subr.bf16.mxu0 0
    %840 = vmatpush1.bf16.msra.mxu0 0
    %841 = vmatprep.subr.bf16.mxu0 0
    %842 = vmatpush1.bf16.msra.mxu0 0
    %843 = vmatprep.subr.bf16.mxu0 0
    %844 = vmatpush1.bf16.msra.mxu0 0
    %845 = vmatprep.subr.bf16.mxu0 0
    %846 = vmatpush1.bf16.msra.mxu0 0
    %847 = vmatprep.subr.bf16.mxu0 0
    %848 = vmatpush1.bf16.msra.mxu0 0
    %849 = vmatprep.subr.bf16.mxu0 0
    %850 = vmatpush1.bf16.msra.mxu0 0
    %851 = vmatprep.subr.bf16.mxu0 0
    %852 = vmatpush1.bf16.msra.mxu0 0
    %853 = vmatprep.mubr.bf16.mxu0 0
    %854 = vmatmul.mubr.bf16.gmra.mrb[0].mxu0 %v819
    %v855 = vpop.f32.mrb[0].mxu0
    %v856 = vadd.f32 %v804, %v855
    %v857 = vpop.f32.mrb[0].mxu0
    %v858 = vpop.f32.mrb[0].mxu0
    %v859 = vpop.f32.mrb[0].mxu0
    %860 = vdwg.mxu0
    %v861 = vmax.f32 %v856, 0.0
    %v862 = vpack.c.bf16 %v861, %v861
    %v863 = vlaneseq
    %v864 = vshrl.u32 %v863, 7
    %v865 = vsub.s32 3, %v864
    %v866 = vrot.slane %v712, %v865
    %v883 = vunpack.c.l.b16 %v695
    %v884 = vunpack.c.l.b16 %v696
    %v885 = vunpack.c.l.b16 %v697
    %v886 = vunpack.c.l.b16 %v698
    %v887 = vunpack.c.l.b16 %v699
    %v888 = vunpack.c.l.b16 %v700
    %v889 = vunpack.c.l.b16 %v701
    %v890 = vunpack.c.l.b16 %v702
    %v891 = vunpack.c.l.b16 %v703
    %v892 = vunpack.c.l.b16 %v704
    %v893 = vunpack.c.l.b16 %v705
    %v894 = vunpack.c.l.b16 %v706
    %v895 = vunpack.c.l.b16 %v707
    %v896 = vunpack.c.l.b16 %v708
    %v897 = vunpack.c.l.b16 %v709
    %v898 = vunpack.c.l.b16 %v710
    %v899 = vpack.c.b16 %v884, %v883
    %v900 = vpack.c.b16 %v886, %v885
    %v901 = vpack.c.b16 %v888, %v887
    %v902 = vpack.c.b16 %v890, %v889
    %v903 = vpack.c.b16 %v892, %v891
    %v904 = vpack.c.b16 %v894, %v893
    %v905 = vpack.c.b16 %v896, %v895
    %v906 = vpack.c.b16 %v898, %v897
    %915 = vmatprep.subr.bf16.mxu0 0
    %916 = vmatpush1.bf16.msra.mxu0 %v899
    %917 = vmatprep.subr.bf16.mxu0 0
    %918 = vmatpush1.bf16.msra.mxu0 %v900
    %919 = vmatprep.subr.bf16.mxu0 0
    %920 = vmatpush1.bf16.msra.mxu0 %v901
    %921 = vmatprep.subr.bf16.mxu0 0
    %922 = vmatpush1.bf16.msra.mxu0 %v902
    %923 = vmatprep.subr.bf16.mxu0 0
    %924 = vmatpush1.bf16.msra.mxu0 %v903
    %925 = vmatprep.subr.bf16.mxu0 0
    %926 = vmatpush1.bf16.msra.mxu0 %v904
    %927 = vmatprep.subr.bf16.mxu0 0
    %928 = vmatpush1.bf16.msra.mxu0 %v905
    %929 = vmatprep.subr.bf16.mxu0 0
    %930 = vmatpush1.bf16.msra.mxu0 %v906
    %931 = vmatprep.subr.bf16.mxu0 0
    %932 = vmatpush1.bf16.msra.mxu0 0
    %933 = vmatprep.subr.bf16.mxu0 0
    %934 = vmatpush1.bf16.msra.mxu0 0
    %935 = vmatprep.subr.bf16.mxu0 0
    %936 = vmatpush1.bf16.msra.mxu0 0
    %937 = vmatprep.subr.bf16.mxu0 0
    %938 = vmatpush1.bf16.msra.mxu0 0
    %939 = vmatprep.subr.bf16.mxu0 0
    %940 = vmatpush1.bf16.msra.mxu0 0
    %941 = vmatprep.subr.bf16.mxu0 0
    %942 = vmatpush1.bf16.msra.mxu0 0
    %943 = vmatprep.subr.bf16.mxu0 0
    %944 = vmatpush1.bf16.msra.mxu0 0
    %945 = vmatprep.subr.bf16.mxu0 0
    %946 = vmatpush1.bf16.msra.mxu0 0
    %947 = vmatprep.mubr.bf16.mxu0 0
    %948 = vmatmul.mubr.bf16.gmra.mrb[0].mxu0 %v862
    %v949 = vpop.f32.mrb[0].mxu0
    %v950 = vadd.f32 %v866, %v949
    %v951 = vpop.f32.mrb[0].mxu0
    %v952 = vpop.f32.mrb[0].mxu0
    %v953 = vpop.f32.mrb[0].mxu0
    %954 = vdwg.mxu0
    %v955 = vadd.f32 %v798, %v950
    %v956 = vsel %vm140, %v955, 0.0
    %957 = vadd.xlane.f32.xlu0 %v956
    %v958 = vpop.xlane.xlu0 %957
    %v959 = vmul.f32 %v958, %v188
    %v960 = vsub.f32 %v955, %v959
    %v961 = vmul.f32 %v960, %v960
    %v962 = vsel %vm140, %v961, 0.0
    %963 = vadd.xlane.f32.xlu0 %v962
    %v964 = vpop.xlane.xlu0 %963
    %v965 = vmul.f32 %v964, %v188
    %v966 = vadd.f32 %v965, 1e-05
    %v967 = vrsqrt.pop %v966
    %v968 = vmul.f32 %v960, %v967
    %v969 = vlaneseq
    %v970 = vshrl.u32 %v969, 7
    %v971 = vsub.s32 4, %v970
    %v972 = vrot.slane %v712, %v971
    %v973 = vmul.f32 %v968, %v972
    %v974 = vlaneseq
    %v975 = vshrl.u32 %v974, 7
    %v976 = vsub.s32 5, %v975
    %v977 = vrot.slane %v712, %v976
    %v978 = vadd.f32 %v973, %v977
    %v979 = vmax.f32 %v978, 0.0
    %v980 = vpack.c.bf16 %v979, %v979
    %v981 = vld [vmem:[%s8] sm:$0xf]
    %v982 = vld [vmem:[%s8 + $0x4] sm:$0xf]
    %v983 = vld [vmem:[%s8 + $0x8] sm:$0xf]
    %v984 = vld [vmem:[%s8 + $0xc] sm:$0xf]
    %v985 = vld [vmem:[%s9] sm:$0x1]
    %v987 = vlaneseq
    %v988 = vshrl.u32 %v987, 7
    %v989 = vsub.s32 0, %v988
    %v990 = vrot.slane %v985, %v989
    %v996 = vunpack.c.l.b16 %v981
    %v997 = vunpack.c.l.b16 %v982
    %v998 = vunpack.c.l.b16 %v983
    %v999 = vunpack.c.l.b16 %v984
    %v1000 = vpack.c.b16 %v997, %v996
    %v1001 = vpack.c.b16 %v999, %v998
    %v1005 = vsel %vm140, %v980, 0
    %1007 = vmatprep.subr.bf16.mxu0 0
    %1008 = vmatpush1.bf16.msra.mxu0 %v1000
    %1009 = vmatprep.subr.bf16.mxu0 0
    %1010 = vmatpush1.bf16.msra.mxu0 %v1001
    %1011 = vmatprep.subr.bf16.mxu0 0
    %1012 = vmatpush1.bf16.msra.mxu0 0
    %1013 = vmatprep.subr.bf16.mxu0 0
    %1014 = vmatpush1.bf16.msra.mxu0 0
    %1015 = vmatprep.subr.bf16.mxu0 0
    %1016 = vmatpush1.bf16.msra.mxu0 0
    %1017 = vmatprep.subr.bf16.mxu0 0
    %1018 = vmatpush1.bf16.msra.mxu0 0
    %1019 = vmatprep.subr.bf16.mxu0 0
    %1020 = vmatpush1.bf16.msra.mxu0 0
    %1021 = vmatprep.subr.bf16.mxu0 0
    %1022 = vmatpush1.bf16.msra.mxu0 0
    %1023 = vmatprep.subr.bf16.mxu0 0
    %1024 = vmatpush1.bf16.msra.mxu0 0
    %1025 = vmatprep.subr.bf16.mxu0 0
    %1026 = vmatpush1.bf16.msra.mxu0 0
    %1027 = vmatprep.subr.bf16.mxu0 0
    %1028 = vmatpush1.bf16.msra.mxu0 0
    %1029 = vmatprep.subr.bf16.mxu0 0
    %1030 = vmatpush1.bf16.msra.mxu0 0
    %1031 = vmatprep.subr.bf16.mxu0 0
    %1032 = vmatpush1.bf16.msra.mxu0 0
    %1033 = vmatprep.subr.bf16.mxu0 0
    %1034 = vmatpush1.bf16.msra.mxu0 0
    %1035 = vmatprep.subr.bf16.mxu0 0
    %1036 = vmatpush1.bf16.msra.mxu0 0
    %1037 = vmatprep.subr.bf16.mxu0 0
    %1038 = vmatpush1.bf16.msra.mxu0 0
    %1039 = vmatprep.mubr.bf16.mxu0 0
    %1040 = vmatmul.mubr.bf16.gmra.mrb[0].mxu0 %v1005
    %v1041 = vpop.f32.mrb[0].mxu0
    %v1042 = vadd.f32 %v990, %v1041
    %v1043 = vpop.f32.mrb[0].mxu0
    %v1044 = vpop.f32.mrb[0].mxu0
    %v1045 = vpop.f32.mrb[0].mxu0
    %1046 = vdwg.mxu0
    %1047 = vst [vmem:[#allocation2] sm:$0xff] %v1042
    // Predicated region
    $region42: #{tpu_custom_call.1} parent=1 // pred_check
      _
    $region43: #{tpu_custom_call.1} parent=1 // pred_check_branch
      %1049 = sbr.rel (0) target = $region45
    $region44: #{tpu_custom_call.1} parent=1 // pred_region
      %s1051 = ssub.s32 128, 128
      %1052 = vsyncadd [#allocation3], %s1051
      %s1054 = sshll.u32 [#allocation2], 4
      %s1055 = int_to_ptr.vmem [resolvable:$true] %s1054
      %1057 = dma.vmem_to_hbm [thread:$0]  %s1055, 128, %s10, [#allocation3]
    $region45: #{tpu_custom_call.1} parent=1 // pred_fallthru
      _
    // Predicated region
    $region46: #{tpu_custom_call.1} parent=1 // pred_check
      _
    $region47: #{tpu_custom_call.1} parent=1 // pred_check_branch
      %1059 = sbr.rel (0) target = $region49
    $region48: #{tpu_custom_call.1} parent=1 // pred_region
      %1060 = dma.done [#allocation3], 128
    $region49: #{tpu_custom_call.1} parent=1 // pred_fallthru
      _
    %1061 = vsyncpa [#allocation3], 1

</llo_original>
